<compile_context>
chip_gen: v7x
topology: tpu7x:2x2x1
jax: 0.10.0
libtpu: 0.0.40
codegen_flags: <defaults>
</compile_context>

<pallas_src>
import functools

import jax
import jax.numpy as jnp
from jax import lax
from jax.experimental import pallas as pl
from jax.experimental.pallas import tpu as pltpu


def _round_up(n, m):
    return ((n + m - 1) // m) * m


def _nbytes(a):
    return int(a.size) * int(jnp.dtype(a.dtype).itemsize)


# ----------------------------- Pallas kernel --------------------------------

def envmodel_kernel(x_ref, st_ref, w1x_ref, w1e_ref, w2_ref, wh_ref, b_ref,
                    out_ref, *, num_states):
    """One (TB, ...) batch tile of the EnvModel forward pass.

    fc1 :  relu( x @ W1x + onehot(stations)+bias_lane @ W1E )
           (embedding table AND b1 folded into W1E at prepare time)
    fc2 :  relu( h1 @ W2 + b2 )
    head:  h2 @ Wh + bh    (statePrime & reward fused, lane-dense 128 output)
    """
    tb, s_slots = st_ref.shape
    k_oh = w1e_ref.shape[0]

    st = st_ref[...]                                         # (TB, S) int32
    col = lax.broadcasted_iota(jnp.int32, (tb, k_oh), 1)     # (TB, K_OH)

    # Combined one-hot + always-on bias lane: boolean ORs, single cast.
    # Lane s*num_states + st[b, s] is hot for every slot s; lane
    # s_slots*num_states is the always-on bias lane (b1 folded into W1E).
    mask = col == (s_slots * num_states)
    for s in range(s_slots):
        mask = mask | (col == (st[:, s:s + 1] + s * num_states))
    oh = mask.astype(jnp.float32).astype(jnp.bfloat16)       # (TB, K_OH) bf16

    # fc1 (b1 already inside W1E via the bias lane), f32 accumulation + ReLU.
    h1 = jnp.dot(x_ref[...].astype(jnp.bfloat16), w1x_ref[...],
                 preferred_element_type=jnp.float32)
    h1 = h1 + jnp.dot(oh, w1e_ref[...], preferred_element_type=jnp.float32)
    h1 = jnp.maximum(h1, 0.0)

    # fc2 + ReLU (H2 zero-padded to 128 lanes).
    h2 = jnp.dot(h1.astype(jnp.bfloat16), w2_ref[...],
                 preferred_element_type=jnp.float32)
    h2 = jnp.maximum(h2 + b_ref[0:1, :w2_ref.shape[1]], 0.0)

    # Fused statePrime + reward heads -> one lane-dense (TB, 128) store.
    out_ref[...] = (jnp.dot(h2.astype(jnp.bfloat16), wh_ref[...],
                            preferred_element_type=jnp.float32)
                    + b_ref[1:2, :out_ref.shape[1]]).astype(out_ref.dtype)


# ------------------------------- wrapper -------------------------------------

def _cost_estimate(batch, kp, out_lanes, x, stations):
    flops = 2 * batch * (kp["w1x"].shape[0] * kp["w1x"].shape[1]
                         + kp["w1e"].shape[0] * kp["w1e"].shape[1]
                         + kp["w2"].shape[0] * kp["w2"].shape[1]
                         + kp["wh"].shape[0] * kp["wh"].shape[1])
    bytes_accessed = (_nbytes(x) + _nbytes(stations) + batch * out_lanes * 4
                      + sum(_nbytes(v) for v in kp.values()))
    return pl.CostEstimate(flops=flops, transcendentals=0,
                           bytes_accessed=bytes_accessed)


def envmodel_forward(x, stations, kp, num_states, block_b=512):
    """x: (B, OTHER_SIZE) f32, stations: (B, 2*car_num+2) int32.

    Returns (statePrime (B, num_states), reward (B, 1)).

    B <= block_b : grid-less single invocation (tiny-batch latency path).
    B >  block_b : 1-D grid over the batch; activations blocked (block_b, .),
                   weights VMEM-resident via constant index_maps, batch axis
                   marked "parallel" (2x on v7x's two TensorCores).
    Per-row live working set is ~2.5 KB, so block_b <= 2048 stays far below
    the default scoped-VMEM limit on v5e/v6e/v7x — no vmem_limit override
    needed.
    """
    batch = x.shape[0]
    nh = kp["wh"].shape[1]
    kernel = functools.partial(envmodel_kernel, num_states=num_states)
    weight_args = (kp["w1x"], kp["w1e"], kp["w2"], kp["wh"], kp["b"])

    if batch <= block_b:
        vmem = pl.BlockSpec(memory_space=pltpu.MemorySpace.VMEM)
        out = pl.pallas_call(
            kernel,
            out_shape=jax.ShapeDtypeStruct((batch, nh), jnp.float32),
            in_specs=[vmem] * 7,
            out_specs=vmem,
            compiler_params=pltpu.CompilerParams(),
            cost_estimate=_cost_estimate(batch, kp, nh, x, stations),
        )(x, stations, *weight_args)
    else:
        block_b = _round_up(block_b, 8)
        bp = _round_up(batch, block_b)
        if bp != batch:
            # Padded rows use station index 0 (valid) and are sliced off below.
            x = jnp.pad(x, ((0, bp - batch), (0, 0)))
            stations = jnp.pad(stations, ((0, bp - batch), (0, 0)))

        const = lambda i: (0, 0)                  # weights: VMEM-resident
        in_specs = [
            pl.BlockSpec((block_b, x.shape[1]), lambda i: (i, 0)),
            pl.BlockSpec((block_b, stations.shape[1]), lambda i: (i, 0)),
            pl.BlockSpec(kp["w1x"].shape, const),
            pl.BlockSpec(kp["w1e"].shape, const),
            pl.BlockSpec(kp["w2"].shape, const),
            pl.BlockSpec(kp["wh"].shape, const),
            pl.BlockSpec(kp["b"].shape, const),
        ]
        out = pl.pallas_call(
            kernel,
            out_shape=jax.ShapeDtypeStruct((bp, nh), jnp.float32),
            grid=(bp // block_b,),
            in_specs=in_specs,
            out_specs=pl.BlockSpec((block_b, nh), lambda i: (i, 0)),
            compiler_params=pltpu.CompilerParams(
                dimension_semantics=("parallel",)),
            cost_estimate=_cost_estimate(bp, kp, nh, x, stations),
        )(x, stations, *weight_args)
        out = out[:batch]

    state_prime = out[:, :num_states]
    reward = out[:, num_states:num_states + 1]   # coupled to prepare_params layout
    return state_prime, reward


# --------------------------- parameter construction --------------------------

def init_params(key, num_states, car_num, h1=256, h2=64, emb_size=10):
    """Original-module parameterization (f32), PyTorch layout transposed to
    (in_features, out_features) so y = x @ W + b."""
    other_size = num_states + 2 - 2 * car_num - 2
    in_size = other_size + emb_size * (2 * car_num + 2)
    ks = jax.random.split(key, 10)

    def normal(k, shape, std=0.1):
        return (std * jax.random.normal(k, shape)).astype(jnp.float32)

    def bias(k, n, fan_in):
        bound = 1.0 / jnp.sqrt(jnp.float32(fan_in))
        return jax.random.uniform(k, (1, n), minval=-bound,
                                  maxval=bound).astype(jnp.float32)

    params = {
        "w1":  normal(ks[0], (in_size, h1)),
        "b1":  bias(ks[1], h1, in_size),
        "w2":  normal(ks[2], (h1, h2)),
        "b2":  bias(ks[3], h2, h1),
        "wsp": normal(ks[4], (h2, num_states)),
        "bsp": bias(ks[5], num_states, h2),
        "wr":  normal(ks[6], (h2, 1)),
        "br":  bias(ks[7], 1, h2),
        "emb": normal(ks[8], (num_states, emb_size)),
    }
    return params, other_size


def prepare_params(params, num_states, car_num, emb_size=10):
    """Fold embedding AND b1 into fc1, fuse the two heads, zero-pad to
    hardware-friendly sizes, cast weights to bf16 (biases stay f32).
    NOTE: bf16 weight storage + bf16 activation casts are intentional
    precision loss vs. the f32 module (covered by the test tolerance)."""
    S = 2 * car_num + 2
    H1 = params["w1"].shape[1]
    H2 = params["w2"].shape[1]
    other_size = params["w1"].shape[0] - emb_size * S

    w1 = params["w1"]                                   # (other + S*EMB, H1)
    w1x = w1[:other_size, :]                            # (other, H1)

    # Row (s*num_states + n) of W1E == emb[n] @ w1[other + s*EMB : other+(s+1)*EMB].
    w1_slots = w1[other_size:, :].reshape(S, emb_size, H1)          # (S, EMB, H1)
    w1e = jnp.einsum("ne,seh->snh", params["emb"], w1_slots)        # (S, N, H1)
    w1e = w1e.reshape(S * num_states, H1)
    # Append b1 as the always-on "bias lane" row, then pad K to the bf16
    # sublane tile (16): 160 + 1 -> 176.
    w1e = jnp.concatenate([w1e, params["b1"]], axis=0)              # (161, H1)
    k_oh = _round_up(S * num_states + 1, 16)
    w1e = jnp.pad(w1e, ((0, k_oh - (S * num_states + 1)), (0, 0)))

    # Pad H2 (64 -> 128) with zeros.
    h2p = _round_up(H2, 128)
    w2 = jnp.pad(params["w2"], ((0, 0), (0, h2p - H2)))
    b2 = jnp.pad(params["b2"], ((0, 0), (0, h2p - H2)))

    # Fuse statePrime + reward heads, pad output lanes to 128.
    nh = _round_up(num_states + 1, 128)
    wh = jnp.zeros((h2p, nh), jnp.float32)
    wh = wh.at[:H2, :num_states].set(params["wsp"])
    wh = wh.at[:H2, num_states:num_states + 1].set(params["wr"])
    bh = jnp.zeros((1, nh), jnp.float32)
    bh = bh.at[:, :num_states].set(params["bsp"])
    bh = bh.at[:, num_states:num_states + 1].set(params["br"])

    # Pack the two remaining biases into one small f32 operand.
    bw = max(h2p, nh)
    b_packed = jnp.zeros((2, bw), jnp.float32)
    b_packed = b_packed.at[0, :h2p].set(b2[0])
    b_packed = b_packed.at[1, :nh].set(bh[0])

    bf16 = jnp.bfloat16
    return {
        "w1x": w1x.astype(bf16),
        "w1e": w1e.astype(bf16),
        "w2":  w2.astype(bf16),
        "wh":  wh.astype(bf16),
        "b":   b_packed,              # f32 (2, 128)
    }


# ------------------------------- reference -----------------------------------

def envmodel_reference(x, stations, params):
    emb = params["emb"][stations].reshape(x.shape[0], -1)
    xin = jnp.concatenate([x, emb], axis=1)
    h1 = jnp.maximum(xin @ params["w1"] + params["b1"], 0.0)
    h2 = jnp.maximum(h1 @ params["w2"] + params["b2"], 0.0)
    return h2 @ params["wsp"] + params["bsp"], h2 @ params["wr"] + params["br"]


# --------------------------------- main ---------------------------------------

if __name__ == "__main__":
    NUM_STATES = 20
    CAR_NUM = 3
    H1, H2, EMB = 256, 64, 10

    key = jax.random.PRNGKey(0)
    kparam, kx, kst = jax.random.split(key, 3)

    params, other_size = init_params(kparam, NUM_STATES, CAR_NUM, H1, H2, EMB)
    kparams = prepare_params(params, NUM_STATES, CAR_NUM, EMB)   # one-time fold/pad/cast

    fwd = jax.jit(envmodel_forward, static_argnums=(3, 4))

    # Batched rollout rows -> grid path (block_b=128, 2 "parallel" grid steps;
    # weights VMEM-resident across steps).
    B = 256
    x = jax.random.normal(kx, (B, other_size), dtype=jnp.float32)
    stations = jax.random.randint(kst, (B, 2 * CAR_NUM + 2), 0, NUM_STATES,
                                  dtype=jnp.int32)

    sp, r = fwd(x, stations, kparams, NUM_STATES, 128)
    jax.block_until_ready((sp, r))

    sp_ref, r_ref = envmodel_reference(x, stations, params)
    assert sp.shape == (B, NUM_STATES) and r.shape == (B, 1)
    # bf16 weights/activation casts -> modest tolerance vs. the f32 reference.
    assert jnp.allclose(sp, sp_ref, atol=3e-2, rtol=3e-2), \
        float(jnp.max(jnp.abs(sp - sp_ref)))
    assert jnp.allclose(r, r_ref, atol=3e-2, rtol=3e-2), \
        float(jnp.max(jnp.abs(r - r_ref)))

    # Tiny-batch latency path (grid-less single invocation) stays correct too.
    sp8, r8 = fwd(x[:8], stations[:8], kparams, NUM_STATES, 128)
    jax.block_until_ready((sp8, r8))
    assert jnp.allclose(sp8, sp_ref[:8], atol=3e-2, rtol=3e-2)
    assert jnp.allclose(r8, r_ref[:8], atol=3e-2, rtol=3e-2)

    print("KERNEL_OK")
</pallas_src>

<mosaic_0001>
module attributes {stable_mosaic.version = 11 : i64} {
  func.func @envmodel_kernel(%arg0: i32, %arg1: memref<128x14xf32, #tpu.memory_space<vmem>>, %arg2: memref<128x8xi32, #tpu.memory_space<vmem>>, %arg3: memref<14x256xbf16, #tpu.memory_space<vmem>>, %arg4: memref<176x256xbf16, #tpu.memory_space<vmem>>, %arg5: memref<256x128xbf16, #tpu.memory_space<vmem>>, %arg6: memref<128x128xbf16, #tpu.memory_space<vmem>>, %arg7: memref<2x128xf32, #tpu.memory_space<vmem>>, %arg8: memref<128x128xf32, #tpu.memory_space<vmem>>) attributes {dimension_semantics = [#tpu.dimension_semantics<parallel>], iteration_bounds = array<i64: 2>, scalar_prefetch = 0 : i64, scratch_operands = 0 : i64, tpu.core_type = #tpu.core_type<tc>, window_params = [{transform_indices = @transform_0, window_bounds = array<i64: 128, 14>}, {transform_indices = @transform_1, window_bounds = array<i64: 128, 8>}, {pipeline_mode = #tpu.pipeline_mode<synchronous>, transform_indices = @transform_2, window_bounds = array<i64: 14, 256>}, {pipeline_mode = #tpu.pipeline_mode<synchronous>, transform_indices = @transform_3, window_bounds = array<i64: 176, 256>}, {pipeline_mode = #tpu.pipeline_mode<synchronous>, transform_indices = @transform_4, window_bounds = array<i64: 256, 128>}, {pipeline_mode = #tpu.pipeline_mode<synchronous>, transform_indices = @transform_5, window_bounds = array<i64: 128, 128>}, {pipeline_mode = #tpu.pipeline_mode<synchronous>, transform_indices = @transform_6, window_bounds = array<i64: 2, 128>}, {transform_indices = @transform_7, window_bounds = array<i64: 128, 128>}]} {
    %c0 = arith.constant 0 : index
    %c0_0 = arith.constant 0 : index
    %0 = vector.load %arg2[%c0, %c0_0] : memref<128x8xi32, #tpu.memory_space<vmem>>, vector<128x8xi32>
    %1 = tpu.iota {dimensions = array<i32: 1>} : vector<128x176xi32>
    %c160_i32 = arith.constant 160 : i32
    %2 = vector.broadcast %c160_i32 : i32 to vector<128x176xi32>
    %3 = arith.cmpi eq, %1, %2 : vector<128x176xi32>
    %4 = vector.extract_strided_slice %0 {offsets = [0, 0], sizes = [128, 1], strides = [1, 1]} : vector<128x8xi32> to vector<128x1xi32>
    %c0_i32 = arith.constant 0 : i32
    %5 = vector.broadcast %c0_i32 : i32 to vector<128x1xi32>
    %6 = arith.addi %4, %5 : vector<128x1xi32>
    %7 = vector.broadcast %6 : vector<128x1xi32> to vector<128x176xi32>
    %8 = arith.cmpi eq, %1, %7 : vector<128x176xi32>
    %9 = arith.ori %3, %8 : vector<128x176xi1>
    %10 = vector.extract_strided_slice %0 {offsets = [0, 1], sizes = [128, 1], strides = [1, 1]} : vector<128x8xi32> to vector<128x1xi32>
    %c20_i32 = arith.constant 20 : i32
    %11 = vector.broadcast %c20_i32 : i32 to vector<128x1xi32>
    %12 = arith.addi %10, %11 : vector<128x1xi32>
    %13 = vector.broadcast %12 : vector<128x1xi32> to vector<128x176xi32>
    %14 = arith.cmpi eq, %1, %13 : vector<128x176xi32>
    %15 = arith.ori %9, %14 : vector<128x176xi1>
    %16 = vector.extract_strided_slice %0 {offsets = [0, 2], sizes = [128, 1], strides = [1, 1]} : vector<128x8xi32> to vector<128x1xi32>
    %c40_i32 = arith.constant 40 : i32
    %17 = vector.broadcast %c40_i32 : i32 to vector<128x1xi32>
    %18 = arith.addi %16, %17 : vector<128x1xi32>
    %19 = vector.broadcast %18 : vector<128x1xi32> to vector<128x176xi32>
    %20 = arith.cmpi eq, %1, %19 : vector<128x176xi32>
    %21 = arith.ori %15, %20 : vector<128x176xi1>
    %22 = vector.extract_strided_slice %0 {offsets = [0, 3], sizes = [128, 1], strides = [1, 1]} : vector<128x8xi32> to vector<128x1xi32>
    %c60_i32 = arith.constant 60 : i32
    %23 = vector.broadcast %c60_i32 : i32 to vector<128x1xi32>
    %24 = arith.addi %22, %23 : vector<128x1xi32>
    %25 = vector.broadcast %24 : vector<128x1xi32> to vector<128x176xi32>
    %26 = arith.cmpi eq, %1, %25 : vector<128x176xi32>
    %27 = arith.ori %21, %26 : vector<128x176xi1>
    %28 = vector.extract_strided_slice %0 {offsets = [0, 4], sizes = [128, 1], strides = [1, 1]} : vector<128x8xi32> to vector<128x1xi32>
    %c80_i32 = arith.constant 80 : i32
    %29 = vector.broadcast %c80_i32 : i32 to vector<128x1xi32>
    %30 = arith.addi %28, %29 : vector<128x1xi32>
    %31 = vector.broadcast %30 : vector<128x1xi32> to vector<128x176xi32>
    %32 = arith.cmpi eq, %1, %31 : vector<128x176xi32>
    %33 = arith.ori %27, %32 : vector<128x176xi1>
    %34 = vector.extract_strided_slice %0 {offsets = [0, 5], sizes = [128, 1], strides = [1, 1]} : vector<128x8xi32> to vector<128x1xi32>
    %c100_i32 = arith.constant 100 : i32
    %35 = vector.broadcast %c100_i32 : i32 to vector<128x1xi32>
    %36 = arith.addi %34, %35 : vector<128x1xi32>
    %37 = vector.broadcast %36 : vector<128x1xi32> to vector<128x176xi32>
    %38 = arith.cmpi eq, %1, %37 : vector<128x176xi32>
    %39 = arith.ori %33, %38 : vector<128x176xi1>
    %40 = vector.extract_strided_slice %0 {offsets = [0, 6], sizes = [128, 1], strides = [1, 1]} : vector<128x8xi32> to vector<128x1xi32>
    %c120_i32 = arith.constant 120 : i32
    %41 = vector.broadcast %c120_i32 : i32 to vector<128x1xi32>
    %42 = arith.addi %40, %41 : vector<128x1xi32>
    %43 = vector.broadcast %42 : vector<128x1xi32> to vector<128x176xi32>
    %44 = arith.cmpi eq, %1, %43 : vector<128x176xi32>
    %45 = arith.ori %39, %44 : vector<128x176xi1>
    %46 = vector.extract_strided_slice %0 {offsets = [0, 7], sizes = [128, 1], strides = [1, 1]} : vector<128x8xi32> to vector<128x1xi32>
    %c140_i32 = arith.constant 140 : i32
    %47 = vector.broadcast %c140_i32 : i32 to vector<128x1xi32>
    %48 = arith.addi %46, %47 : vector<128x1xi32>
    %49 = vector.broadcast %48 : vector<128x1xi32> to vector<128x176xi32>
    %50 = arith.cmpi eq, %1, %49 : vector<128x176xi32>
    %51 = arith.ori %45, %50 : vector<128x176xi1>
    %52 = arith.extui %51 : vector<128x176xi1> to vector<128x176xi32>
    %53 = arith.sitofp %52 : vector<128x176xi32> to vector<128x176xf32>
    %54 = arith.truncf %53 : vector<128x176xf32> to vector<128x176xbf16>
    %c0_1 = arith.constant 0 : index
    %c0_2 = arith.constant 0 : index
    %55 = vector.load %arg1[%c0_1, %c0_2] : memref<128x14xf32, #tpu.memory_space<vmem>>, vector<128x14xf32>
    %56 = arith.truncf %55 : vector<128x14xf32> to vector<128x14xbf16>
    %c0_3 = arith.constant 0 : index
    %c0_4 = arith.constant 0 : index
    %57 = vector.load %arg3[%c0_3, %c0_4] : memref<14x256xbf16, #tpu.memory_space<vmem>>, vector<14x256xbf16>
    %cst = arith.constant dense<0.000000e+00> : vector<128x256xf32>
    %58 = tpu.matmul %56, %57, %cst {dimension_numbers = #tpu.dot_dimension_numbers<[1], [0], [0], [1], [0, 0, 1, 1], [], []>} : vector<128x14xbf16>, vector<14x256xbf16>, vector<128x256xf32> -> vector<128x256xf32>
    %c0_5 = arith.constant 0 : index
    %c0_6 = arith.constant 0 : index
    %59 = vector.load %arg4[%c0_5, %c0_6] : memref<176x256xbf16, #tpu.memory_space<vmem>>, vector<176x256xbf16>
    %cst_7 = arith.constant dense<0.000000e+00> : vector<128x256xf32>
    %60 = tpu.matmul %54, %59, %cst_7 {dimension_numbers = #tpu.dot_dimension_numbers<[1], [0], [0], [1], [0, 0, 1, 1], [], []>} : vector<128x176xbf16>, vector<176x256xbf16>, vector<128x256xf32> -> vector<128x256xf32>
    %61 = arith.addf %58, %60 : vector<128x256xf32>
    %cst_8 = arith.constant 0.000000e+00 : f32
    %62 = vector.broadcast %cst_8 : f32 to vector<128x256xf32>
    %63 = arith.maximumf %61, %62 : vector<128x256xf32>
    %64 = arith.truncf %63 : vector<128x256xf32> to vector<128x256xbf16>
    %c0_9 = arith.constant 0 : index
    %c0_10 = arith.constant 0 : index
    %65 = vector.load %arg5[%c0_9, %c0_10] : memref<256x128xbf16, #tpu.memory_space<vmem>>, vector<256x128xbf16>
    %cst_11 = arith.constant dense<0.000000e+00> : vector<128x128xf32>
    %66 = tpu.matmul %64, %65, %cst_11 {dimension_numbers = #tpu.dot_dimension_numbers<[1], [0], [0], [1], [0, 0, 1, 1], [], []>} : vector<128x256xbf16>, vector<256x128xbf16>, vector<128x128xf32> -> vector<128x128xf32>
    %c0_12 = arith.constant 0 : index
    %c0_13 = arith.constant 0 : index
    %67 = vector.load %arg7[%c0_12, %c0_13] : memref<2x128xf32, #tpu.memory_space<vmem>>, vector<1x128xf32>
    %68 = vector.broadcast %67 : vector<1x128xf32> to vector<128x128xf32>
    %69 = arith.addf %66, %68 : vector<128x128xf32>
    %cst_14 = arith.constant 0.000000e+00 : f32
    %70 = vector.broadcast %cst_14 : f32 to vector<128x128xf32>
    %71 = arith.maximumf %69, %70 : vector<128x128xf32>
    %72 = arith.truncf %71 : vector<128x128xf32> to vector<128x128xbf16>
    %c0_15 = arith.constant 0 : index
    %c0_16 = arith.constant 0 : index
    %73 = vector.load %arg6[%c0_15, %c0_16] : memref<128x128xbf16, #tpu.memory_space<vmem>>, vector<128x128xbf16>
    %cst_17 = arith.constant dense<0.000000e+00> : vector<128x128xf32>
    %74 = tpu.matmul %72, %73, %cst_17 {dimension_numbers = #tpu.dot_dimension_numbers<[1], [0], [0], [1], [0, 0, 1, 1], [], []>} : vector<128x128xbf16>, vector<128x128xbf16>, vector<128x128xf32> -> vector<128x128xf32>
    %c1 = arith.constant 1 : index
    %c0_18 = arith.constant 0 : index
    %75 = vector.load %arg7[%c1, %c0_18] : memref<2x128xf32, #tpu.memory_space<vmem>>, vector<1x128xf32>
    %76 = vector.broadcast %75 : vector<1x128xf32> to vector<128x128xf32>
    %77 = arith.addf %74, %76 : vector<128x128xf32>
    %c0_19 = arith.constant 0 : index
    %c0_20 = arith.constant 0 : index
    %78 = vector.load %arg8[%c0_19, %c0_20] : memref<128x128xf32, #tpu.memory_space<vmem>>, vector<128x128xf32>
    tpu.vector_store %arg8[%c0_19, %c0_20], %77 {strides = array<i32>} : memref<128x128xf32, #tpu.memory_space<vmem>>, vector<128x128xf32>,
    return
  }
  func.func @transform_0(%arg0: i32) -> (i32, i32) {
    %c0_i32 = arith.constant 0 : i32
    %c0_i32_0 = arith.constant 0 : i32
    return %arg0, %c0_i32 : i32, i32
  }
  func.func @transform_1(%arg0: i32) -> (i32, i32) {
    %c0_i32 = arith.constant 0 : i32
    %c0_i32_0 = arith.constant 0 : i32
    return %arg0, %c0_i32 : i32, i32
  }
  func.func @transform_2(%arg0: i32) -> (i32, i32) {
    %c0_i32 = arith.constant 0 : i32
    %c0_i32_0 = arith.constant 0 : i32
    %c0_i32_1 = arith.constant 0 : i32
    return %c0_i32, %c0_i32_0 : i32, i32
  }
  func.func @transform_3(%arg0: i32) -> (i32, i32) {
    %c0_i32 = arith.constant 0 : i32
    %c0_i32_0 = arith.constant 0 : i32
    %c0_i32_1 = arith.constant 0 : i32
    return %c0_i32, %c0_i32_0 : i32, i32
  }
  func.func @transform_4(%arg0: i32) -> (i32, i32) {
    %c0_i32 = arith.constant 0 : i32
    %c0_i32_0 = arith.constant 0 : i32
    %c0_i32_1 = arith.constant 0 : i32
    return %c0_i32, %c0_i32_0 : i32, i32
  }
  func.func @transform_5(%arg0: i32) -> (i32, i32) {
    %c0_i32 = arith.constant 0 : i32
    %c0_i32_0 = arith.constant 0 : i32
    %c0_i32_1 = arith.constant 0 : i32
    return %c0_i32, %c0_i32_0 : i32, i32
  }
  func.func @transform_6(%arg0: i32) -> (i32, i32) {
    %c0_i32 = arith.constant 0 : i32
    %c0_i32_0 = arith.constant 0 : i32
    %c0_i32_1 = arith.constant 0 : i32
    return %c0_i32, %c0_i32_0 : i32, i32
  }
  func.func @transform_7(%arg0: i32) -> (i32, i32) {
    %c0_i32 = arith.constant 0 : i32
    %c0_i32_0 = arith.constant 0 : i32
    return %arg0, %c0_i32 : i32, i32
  }
}

</mosaic_0001>

<llo_original>
// kernel: envmodel_forward.1
$region0: #{envmodel_forward.1}
  #allocation0 [shape = 'u32[]', space=smem, size = 0x4, offset = 0x4, fixed_abs, tag = 'smem constant byte address 0x4 - core index']
  #allocation1 [shape = 'u32[144,128]{1,0:T(1,128)}', space=vmem, size = 0x12000, scoped, tag = 'internal scratch']
  %s0 = inlined_call_operand.vmem [shape: f32[256,14], index: 0, kind: input, shape index: {}]
  %s1 = inlined_call_operand.vmem [shape: s32[256,8], index: 1, kind: input, shape index: {}]
  %s2 = inlined_call_operand.vmem [shape: bf16[14,256], index: 2, kind: input, shape index: {}]
  %s3 = inlined_call_operand.vmem [shape: bf16[176,256], index: 3, kind: input, shape index: {}]
  %s4 = inlined_call_operand.vmem [shape: bf16[256,128], index: 4, kind: input, shape index: {}]
  %s5 = inlined_call_operand.vmem [shape: bf16[128,128], index: 5, kind: input, shape index: {}]
  %s6 = inlined_call_operand.vmem [shape: f32[2,128], index: 6, kind: input, shape index: {}]
  %s7 = inlined_call_operand.vmem [shape: f32[256,128], index: 7, kind: output, shape index: {}]
  %s8 = sld [smem:[#allocation0]]
  $region61: #{envmodel_forward.1} parent=0
    _
  %s10 = ssub.s32 1, %s8
  %s11 = scalar_select 0, %s10, %s8
  loop: start=0, step=1, limit=4
  $region2: #{envmodel_forward.1} parent=0 // loop_pre_header
    _
  $region3: #{envmodel_forward.1} parent=0 // loop_header
    %s13 = sphi 0, %s17
    %p14 = scmp.ge.s32.totalorder %s13, 4
    %s23 = sphi 0, %s25
    %s26 = sphi 0, %s23
    %s27 = sphi 0, %s26
    %s43 = sphi 0, %s27
    %s49 = sphi 0, %s51
    %s52 = sphi 0, %s49
    %s53 = sphi 0, %s52
    %s69 = sphi 0, %s53
    %s73 = sphi 0, %s73
    %s75 = sphi 0, %s73
    %s76 = sphi 0, %s75
    %s90 = sphi 0, %s76
    %s94 = sphi 0, %s94
    %s96 = sphi 0, %s94
    %s97 = sphi 0, %s96
    %s111 = sphi 0, %s97
    %s115 = sphi 0, %s115
    %s117 = sphi 0, %s115
    %s118 = sphi 0, %s117
    %s132 = sphi 0, %s118
    %s136 = sphi 0, %s136
    %s138 = sphi 0, %s136
    %s139 = sphi 0, %s138
    %s153 = sphi 0, %s139
    %s157 = sphi 0, %s157
    %s159 = sphi 0, %s157
    %s160 = sphi 0, %s159
    %s174 = sphi 0, %s160
    %s180 = sphi 0, %s182
    %s183 = sphi 0, %s180
    %s184 = sphi 0, %s183
    %s200 = sphi 0, %s184
  $region4: #{envmodel_forward.1} parent=0 // loop_header_branch
    %16 = sbr.rel (%p14) target = $region8
  $region5: #{envmodel_forward.1} parent=0 // loop_body
    %s18 = ssub.s32 %s13, 1
    %s19 = ssub.s32 %s13, 2
    %s20 = sadd.s32 %s13, 1
    %s21 = ssub.s32 %s13, %s20
    %p22 = scmp.eq.s32.totalorder %s21, 0
    %s24 = sadd.s32 %s23, 1
    %s25 = scalar_select %p22, %s23, %s24
    %p28 = pneg %p22
    %p29 = scmp.eq.s32.totalorder %s13, 1
    %p30 = por %p28, %p29
    %p31 = scmp.ne.s32.totalorder %s23, %s26
    %p32 = scmp.eq.s32.totalorder %s13, 0
    %p33 = por %p31, %p32
    %p34 = scmp.ne.s32.totalorder %s23, %s26
    %p35 = scmp.eq.s32.totalorder %s18, 1
    %p36 = por %p34, %p35
    %p37 = scmp.ne.s32.totalorder %s26, %s27
    %p38 = scmp.eq.s32.totalorder %s18, 0
    %p39 = por %p37, %p38
    %p40 = scmp.ne.s32.totalorder %s26, %s27
    %p41 = scmp.eq.s32.totalorder %s19, 1
    %p42 = por %p40, %p41
    %p44 = scmp.ne.s32.totalorder %s27, %s43
    %p45 = scmp.eq.s32.totalorder %s19, 0
    %p46 = por %p44, %p45
    %s47 = ssub.s32 %s13, %s20
    %p48 = scmp.eq.s32.totalorder %s47, 0
    %s50 = sadd.s32 %s49, 1
    %s51 = scalar_select %p48, %s49, %s50
    %p54 = pneg %p48
    %p55 = scmp.eq.s32.totalorder %s13, 1
    %p56 = por %p54, %p55
    %p57 = scmp.ne.s32.totalorder %s49, %s52
    %p58 = scmp.eq.s32.totalorder %s13, 0
    %p59 = por %p57, %p58
    %p60 = scmp.ne.s32.totalorder %s49, %s52
    %p61 = scmp.eq.s32.totalorder %s18, 1
    %p62 = por %p60, %p61
    %p63 = scmp.ne.s32.totalorder %s52, %s53
    %p64 = scmp.eq.s32.totalorder %s18, 0
    %p65 = por %p63, %p64
    %p66 = scmp.ne.s32.totalorder %s52, %s53
    %p67 = scmp.eq.s32.totalorder %s19, 1
    %p68 = por %p66, %p67
    %p70 = scmp.ne.s32.totalorder %s53, %s69
    %p71 = scmp.eq.s32.totalorder %s19, 0
    %p72 = por %p70, %p71
    %s74 = sadd.s32 %s73, 1
    %p77 = scmp.eq.s32.totalorder %s13, 1
    %p78 = scmp.ne.s32.totalorder %s73, %s75
    %p79 = scmp.eq.s32.totalorder %s13, 0
    %p80 = por %p78, %p79
    %p81 = scmp.ne.s32.totalorder %s73, %s75
    %p82 = scmp.eq.s32.totalorder %s18, 1
    %p83 = por %p81, %p82
    %p84 = scmp.ne.s32.totalorder %s75, %s76
    %p85 = scmp.eq.s32.totalorder %s18, 0
    %p86 = por %p84, %p85
    %p87 = scmp.ne.s32.totalorder %s75, %s76
    %p88 = scmp.eq.s32.totalorder %s19, 1
    %p89 = por %p87, %p88
    %p91 = scmp.ne.s32.totalorder %s76, %s90
    %p92 = scmp.eq.s32.totalorder %s19, 0
    %p93 = por %p91, %p92
    %s95 = sadd.s32 %s94, 1
    %p98 = scmp.eq.s32.totalorder %s13, 1
    %p99 = scmp.ne.s32.totalorder %s94, %s96
    %p100 = scmp.eq.s32.totalorder %s13, 0
    %p101 = por %p99, %p100
    %p102 = scmp.ne.s32.totalorder %s94, %s96
    %p103 = scmp.eq.s32.totalorder %s18, 1
    %p104 = por %p102, %p103
    %p105 = scmp.ne.s32.totalorder %s96, %s97
    %p106 = scmp.eq.s32.totalorder %s18, 0
    %p107 = por %p105, %p106
    %p108 = scmp.ne.s32.totalorder %s96, %s97
    %p109 = scmp.eq.s32.totalorder %s19, 1
    %p110 = por %p108, %p109
    %p112 = scmp.ne.s32.totalorder %s97, %s111
    %p113 = scmp.eq.s32.totalorder %s19, 0
    %p114 = por %p112, %p113
    %s116 = sadd.s32 %s115, 1
    %p119 = scmp.eq.s32.totalorder %s13, 1
    %p120 = scmp.ne.s32.totalorder %s115, %s117
    %p121 = scmp.eq.s32.totalorder %s13, 0
    %p122 = por %p120, %p121
    %p123 = scmp.ne.s32.totalorder %s115, %s117
    %p124 = scmp.eq.s32.totalorder %s18, 1
    %p125 = por %p123, %p124
    %p126 = scmp.ne.s32.totalorder %s117, %s118
    %p127 = scmp.eq.s32.totalorder %s18, 0
    %p128 = por %p126, %p127
    %p129 = scmp.ne.s32.totalorder %s117, %s118
    %p130 = scmp.eq.s32.totalorder %s19, 1
    %p131 = por %p129, %p130
    %p133 = scmp.ne.s32.totalorder %s118, %s132
    %p134 = scmp.eq.s32.totalorder %s19, 0
    %p135 = por %p133, %p134
    %s137 = sadd.s32 %s136, 1
    %p140 = scmp.eq.s32.totalorder %s13, 1
    %p141 = scmp.ne.s32.totalorder %s136, %s138
    %p142 = scmp.eq.s32.totalorder %s13, 0
    %p143 = por %p141, %p142
    %p144 = scmp.ne.s32.totalorder %s136, %s138
    %p145 = scmp.eq.s32.totalorder %s18, 1
    %p146 = por %p144, %p145
    %p147 = scmp.ne.s32.totalorder %s138, %s139
    %p148 = scmp.eq.s32.totalorder %s18, 0
    %p149 = por %p147, %p148
    %p150 = scmp.ne.s32.totalorder %s138, %s139
    %p151 = scmp.eq.s32.totalorder %s19, 1
    %p152 = por %p150, %p151
    %p154 = scmp.ne.s32.totalorder %s139, %s153
    %p155 = scmp.eq.s32.totalorder %s19, 0
    %p156 = por %p154, %p155
    %s158 = sadd.s32 %s157, 1
    %p161 = scmp.eq.s32.totalorder %s13, 1
    %p162 = scmp.ne.s32.totalorder %s157, %s159
    %p163 = scmp.eq.s32.totalorder %s13, 0
    %p164 = por %p162, %p163
    %p165 = scmp.ne.s32.totalorder %s157, %s159
    %p166 = scmp.eq.s32.totalorder %s18, 1
    %p167 = por %p165, %p166
    %p168 = scmp.ne.s32.totalorder %s159, %s160
    %p169 = scmp.eq.s32.totalorder %s18, 0
    %p170 = por %p168, %p169
    %p171 = scmp.ne.s32.totalorder %s159, %s160
    %p172 = scmp.eq.s32.totalorder %s19, 1
    %p173 = por %p171, %p172
    %p175 = scmp.ne.s32.totalorder %s160, %s174
    %p176 = scmp.eq.s32.totalorder %s19, 0
    %p177 = por %p175, %p176
    %s178 = ssub.s32 %s13, %s20
    %p179 = scmp.eq.s32.totalorder %s178, 0
    %s181 = sadd.s32 %s180, 1
    %s182 = scalar_select %p179, %s180, %s181
    %p185 = pneg %p179
    %p186 = scmp.eq.s32.totalorder %s13, 1
    %p187 = por %p185, %p186
    %p188 = scmp.ne.s32.totalorder %s180, %s183
    %p189 = scmp.eq.s32.totalorder %s13, 0
    %p190 = por %p188, %p189
    %p191 = scmp.ne.s32.totalorder %s180, %s183
    %p192 = scmp.eq.s32.totalorder %s18, 1
    %p193 = por %p191, %p192
    %p194 = scmp.ne.s32.totalorder %s183, %s184
    %p195 = scmp.eq.s32.totalorder %s18, 0
    %p196 = por %p194, %p195
    %p197 = scmp.ne.s32.totalorder %s183, %s184
    %p198 = scmp.eq.s32.totalorder %s19, 1
    %p199 = por %p197, %p198
    %p201 = scmp.ne.s32.totalorder %s184, %s200
    %p202 = scmp.eq.s32.totalorder %s19, 0
    %p203 = por %p201, %p202
    %p204 = scmp.le.s32.totalorder 1, %s13
    %p205 = scmp.lt.s32.totalorder %s13, 3
    %p206 = pnand %p204, %p205
    %p207 = pneg %p206
    // Predicated region
    $region9: #{envmodel_forward.1} parent=5 // pred_check
      _
    $region10: #{envmodel_forward.1} parent=5 // pred_check_branch
      %209 = sbr.rel (%p206) target = $region12
    $region11: #{envmodel_forward.1} parent=5 // pred_region
      %s210 = ssub.s32 %s13, 1
      // Predicated region
      $region13: #{envmodel_forward.1} parent=11 // pred_check
        %p211 = pneg %p86
      $region14: #{envmodel_forward.1} parent=11 // pred_check_branch
        %213 = sbr.rel (%p211) target = $region16
      $region15: #{envmodel_forward.1} parent=11 // pred_region
        _
      $region16: #{envmodel_forward.1} parent=11 // pred_fallthru
        _
      // Predicated region
      $region17: #{envmodel_forward.1} parent=11 // pred_check
        %p214 = pneg %p107
      $region18: #{envmodel_forward.1} parent=11 // pred_check_branch
        %216 = sbr.rel (%p214) target = $region20
      $region19: #{envmodel_forward.1} parent=11 // pred_region
        _
      $region20: #{envmodel_forward.1} parent=11 // pred_fallthru
        _
      // Predicated region
      $region21: #{envmodel_forward.1} parent=11 // pred_check
        %p217 = pneg %p128
      $region22: #{envmodel_forward.1} parent=11 // pred_check_branch
        %219 = sbr.rel (%p217) target = $region24
      $region23: #{envmodel_forward.1} parent=11 // pred_region
        _
      $region24: #{envmodel_forward.1} parent=11 // pred_fallthru
        _
      // Predicated region
      $region25: #{envmodel_forward.1} parent=11 // pred_check
        %p220 = pneg %p149
      $region26: #{envmodel_forward.1} parent=11 // pred_check_branch
        %222 = sbr.rel (%p220) target = $region28
      $region27: #{envmodel_forward.1} parent=11 // pred_region
        _
      $region28: #{envmodel_forward.1} parent=11 // pred_fallthru
        _
      // Predicated region
      $region29: #{envmodel_forward.1} parent=11 // pred_check
        %p223 = pneg %p170
      $region30: #{envmodel_forward.1} parent=11 // pred_check_branch
        %225 = sbr.rel (%p223) target = $region32
      $region31: #{envmodel_forward.1} parent=11 // pred_region
        _
      $region32: #{envmodel_forward.1} parent=11 // pred_fallthru
        _
    $region12: #{envmodel_forward.1} parent=5 // pred_fallthru
      _
    %p226 = scmp.lt.s32.totalorder %s13, 2
    // Predicated region
    $region33: #{envmodel_forward.1} parent=5 // pred_check
      %p227 = pneg %p226
    $region34: #{envmodel_forward.1} parent=5 // pred_check_branch
      %229 = sbr.rel (%p227) target = $region36
    $region35: #{envmodel_forward.1} parent=5 // pred_region
      // Predicated region
      $region37: #{envmodel_forward.1} parent=35 // pred_check
        %p230 = pneg %p33
      $region38: #{envmodel_forward.1} parent=35 // pred_check_branch
        %232 = sbr.rel (%p230) target = $region40
      $region39: #{envmodel_forward.1} parent=35 // pred_region
        %s233 = smul.u32 16, %s13
        %p234 = scmp.lt.s32.totalorder %s233, 31
        %s235 = scalar_select %p234, %s233, 31
        %s236 = smul.addr %s235, 8
        %s237 = scalar_lea.vmem %s0, %s236
        %s238 = smul.u32 16, %s13
      $region40: #{envmodel_forward.1} parent=35 // pred_fallthru
        _
      // Predicated region
      $region41: #{envmodel_forward.1} parent=35 // pred_check
        %p239 = pneg %p59
      $region42: #{envmodel_forward.1} parent=35 // pred_check_branch
        %241 = sbr.rel (%p239) target = $region44
      $region43: #{envmodel_forward.1} parent=35 // pred_region
        %s242 = smul.u32 16, %s13
        %p243 = scmp.lt.s32.totalorder %s242, 31
        %s244 = scalar_select %p243, %s242, 31
        %s245 = smul.addr %s244, 8
        %s246 = scalar_lea.vmem %s1, %s245
        %s247 = smul.u32 16, %s13
      $region44: #{envmodel_forward.1} parent=35 // pred_fallthru
        _
    $region36: #{envmodel_forward.1} parent=5 // pred_fallthru
      _
    %p248 = scmp.le.s32.totalorder 1, %s13
    %p249 = scmp.lt.s32.totalorder %s13, 3
    %p250 = pnand %p248, %p249
    %p251 = pneg %p250
    // Predicated region
    $region45: #{envmodel_forward.1} parent=5 // pred_check
      _
    $region46: #{envmodel_forward.1} parent=5 // pred_check_branch
      %253 = sbr.rel (%p250) target = $region48
    $region47: #{envmodel_forward.1} parent=5 // pred_region
      %s254 = ssub.s32 %s13, 1
      %s255 = smul.u32 16, %s18
      %p256 = scmp.lt.s32.totalorder %s255, 31
      %s257 = scalar_select %p256, %s255, 31
      %s258 = smul.addr %s257, 8
      %s259 = scalar_lea.vmem %s0, %s258
      %p260 = pneg %p39
      %p261 = pneg %p36
      %s262 = smul.u32 16, %s18
      %p263 = scmp.lt.s32.totalorder %s262, 31
      %s264 = scalar_select %p263, %s262, 31
      %s265 = smul.addr %s264, 8
      %s266 = scalar_lea.vmem %s1, %s265
      %p267 = pneg %p65
      %p268 = pneg %p62
      %p269 = pneg %p86
      %p270 = pneg %p83
      %p271 = pneg %p107
      %p272 = pneg %p104
      %p273 = pneg %p128
      %p274 = pneg %p125
      %p275 = pneg %p149
      %p276 = pneg %p146
      %p277 = pneg %p170
      %p278 = pneg %p167
      %p279 = pneg %p196
      %p280 = pneg %p193
      %s281 = smul.u32 16, %s18
      %p282 = scmp.lt.s32.totalorder %s281, 31
      %s283 = scalar_select %p282, %s281, 31
      %s284 = smul.addr %s283, 8
      %s285 = scalar_lea.vmem %s7, %s284
      %s286 = smul.u32 16, %s18
      %p287 = scmp.lt.s32.totalorder %s286, 31
      %s288 = scalar_select %p287, %s286, 31
      %s289 = smul.addr %s288, 8
      %s290 = scalar_lea.vmem %s0, %s289
      %s291 = smul.u32 16, %s18
      %s292 = smul.u32 16, %s18
      %p293 = scmp.lt.s32.totalorder %s292, 31
      %s294 = scalar_select %p293, %s292, 31
      %s295 = smul.addr %s294, 8
      %s296 = scalar_lea.vmem %s1, %s295
      %s297 = smul.u32 16, %s18
      %s298 = smul.u32 16, %s18
      %p299 = scmp.lt.s32.totalorder %s298, 31
      %s300 = scalar_select %p299, %s298, 31
      %s301 = smul.addr %s300, 8
      %s302 = scalar_lea.vmem %s7, %s301
      %s303 = smul.u32 16, %s18
      %v305 = vld [vmem:[%s296] sm:$0xff]
      %v306 = vld [vmem:[%s296 + $0x8] sm:$0xff]
      %v307 = vld [vmem:[%s296 + $0x10] sm:$0xff]
      %v308 = vld [vmem:[%s296 + $0x18] sm:$0xff]
      %v309 = vld [vmem:[%s296 + $0x20] sm:$0xff]
      %v310 = vld [vmem:[%s296 + $0x28] sm:$0xff]
      %v311 = vld [vmem:[%s296 + $0x30] sm:$0xff]
      %v312 = vld [vmem:[%s296 + $0x38] sm:$0xff]
      %v313 = vld [vmem:[%s296 + $0x40] sm:$0xff]
      %v314 = vld [vmem:[%s296 + $0x48] sm:$0xff]
      %v315 = vld [vmem:[%s296 + $0x50] sm:$0xff]
      %v316 = vld [vmem:[%s296 + $0x58] sm:$0xff]
      %v317 = vld [vmem:[%s296 + $0x60] sm:$0xff]
      %v318 = vld [vmem:[%s296 + $0x68] sm:$0xff]
      %v319 = vld [vmem:[%s296 + $0x70] sm:$0xff]
      %v320 = vld [vmem:[%s296 + $0x78] sm:$0xff]
      %v321 = vlaneseq
      %v322 = vand.u32 %v321, 127
      %v323 = vadd.s32 %v322, 128
      %vm324 = vcmp.eq.s32.totalorder %v322, 160
      %vm325 = vcmp.eq.s32.totalorder %v323, 160
      %326 = vset.pattern.permute.xlu0 0
      %327 = vperm.xlu0 %326, %v305
      %v328 = vpop.permute.xlu0 %327
      %329 = vset.pattern.permute.xlu0 0
      %330 = vperm.xlu0 %329, %v306
      %v331 = vpop.permute.xlu0 %330
      %332 = vset.pattern.permute.xlu0 0
      %333 = vperm.xlu0 %332, %v307
      %v334 = vpop.permute.xlu0 %333
      %335 = vset.pattern.permute.xlu0 0
      %336 = vperm.xlu0 %335, %v308
      %v337 = vpop.permute.xlu0 %336
      %338 = vset.pattern.permute.xlu0 0
      %339 = vperm.xlu0 %338, %v309
      %v340 = vpop.permute.xlu0 %339
      %341 = vset.pattern.permute.xlu0 0
      %342 = vperm.xlu0 %341, %v310
      %v343 = vpop.permute.xlu0 %342
      %344 = vset.pattern.permute.xlu0 0
      %345 = vperm.xlu0 %344, %v311
      %v346 = vpop.permute.xlu0 %345
      %347 = vset.pattern.permute.xlu0 0
      %348 = vperm.xlu0 %347, %v312
      %v349 = vpop.permute.xlu0 %348
      %350 = vset.pattern.permute.xlu0 0
      %351 = vperm.xlu0 %350, %v313
      %v352 = vpop.permute.xlu0 %351
      %353 = vset.pattern.permute.xlu0 0
      %354 = vperm.xlu0 %353, %v314
      %v355 = vpop.permute.xlu0 %354
      %356 = vset.pattern.permute.xlu0 0
      %357 = vperm.xlu0 %356, %v315
      %v358 = vpop.permute.xlu0 %357
      %359 = vset.pattern.permute.xlu0 0
      %360 = vperm.xlu0 %359, %v316
      %v361 = vpop.permute.xlu0 %360
      %362 = vset.pattern.permute.xlu0 0
      %363 = vperm.xlu0 %362, %v317
      %v364 = vpop.permute.xlu0 %363
      %365 = vset.pattern.permute.xlu0 0
      %366 = vperm.xlu0 %365, %v318
      %v367 = vpop.permute.xlu0 %366
      %368 = vset.pattern.permute.xlu0 0
      %369 = vperm.xlu0 %368, %v319
      %v370 = vpop.permute.xlu0 %369
      %371 = vset.pattern.permute.xlu0 0
      %372 = vperm.xlu0 %371, %v320
      %v373 = vpop.permute.xlu0 %372
      %vm374 = vcmp.eq.s32.totalorder %v322, %v328
      %vm375 = vcmp.eq.s32.totalorder %v323, %v328
      %vm376 = vcmp.eq.s32.totalorder %v322, %v331
      %vm377 = vcmp.eq.s32.totalorder %v323, %v331
      %vm378 = vcmp.eq.s32.totalorder %v322, %v334
      %vm379 = vcmp.eq.s32.totalorder %v323, %v334
      %vm380 = vcmp.eq.s32.totalorder %v322, %v337
      %vm381 = vcmp.eq.s32.totalorder %v323, %v337
      %vm382 = vcmp.eq.s32.totalorder %v322, %v340
      %vm383 = vcmp.eq.s32.totalorder %v323, %v340
      %vm384 = vcmp.eq.s32.totalorder %v322, %v343
      %vm385 = vcmp.eq.s32.totalorder %v323, %v343
      %vm386 = vcmp.eq.s32.totalorder %v322, %v346
      %vm387 = vcmp.eq.s32.totalorder %v323, %v346
      %vm388 = vcmp.eq.s32.totalorder %v322, %v349
      %vm389 = vcmp.eq.s32.totalorder %v323, %v349
      %vm390 = vcmp.eq.s32.totalorder %v322, %v352
      %vm391 = vcmp.eq.s32.totalorder %v323, %v352
      %vm392 = vcmp.eq.s32.totalorder %v322, %v355
      %vm393 = vcmp.eq.s32.totalorder %v323, %v355
      %vm394 = vcmp.eq.s32.totalorder %v322, %v358
      %vm395 = vcmp.eq.s32.totalorder %v323, %v358
      %vm396 = vcmp.eq.s32.totalorder %v322, %v361
      %vm397 = vcmp.eq.s32.totalorder %v323, %v361
      %vm398 = vcmp.eq.s32.totalorder %v322, %v364
      %vm399 = vcmp.eq.s32.totalorder %v323, %v364
      %vm400 = vcmp.eq.s32.totalorder %v322, %v367
      %vm401 = vcmp.eq.s32.totalorder %v323, %v367
      %vm402 = vcmp.eq.s32.totalorder %v322, %v370
      %vm403 = vcmp.eq.s32.totalorder %v323, %v370
      %vm404 = vcmp.eq.s32.totalorder %v322, %v373
      %vm405 = vcmp.eq.s32.totalorder %v323, %v373
      %vm406 = vmor %vm324, %vm374
      %vm407 = vmor %vm325, %vm375
      %vm408 = vmor %vm324, %vm376
      %vm409 = vmor %vm325, %vm377
      %vm410 = vmor %vm324, %vm378
      %vm411 = vmor %vm325, %vm379
      %vm412 = vmor %vm324, %vm380
      %vm413 = vmor %vm325, %vm381
      %vm414 = vmor %vm324, %vm382
      %vm415 = vmor %vm325, %vm383
      %vm416 = vmor %vm324, %vm384
      %vm417 = vmor %vm325, %vm385
      %vm418 = vmor %vm324, %vm386
      %vm419 = vmor %vm325, %vm387
      %vm420 = vmor %vm324, %vm388
      %vm421 = vmor %vm325, %vm389
      %vm422 = vmor %vm324, %vm390
      %vm423 = vmor %vm325, %vm391
      %vm424 = vmor %vm324, %vm392
      %vm425 = vmor %vm325, %vm393
      %vm426 = vmor %vm324, %vm394
      %vm427 = vmor %vm325, %vm395
      %vm428 = vmor %vm324, %vm396
      %vm429 = vmor %vm325, %vm397
      %vm430 = vmor %vm324, %vm398
      %vm431 = vmor %vm325, %vm399
      %vm432 = vmor %vm324, %vm400
      %vm433 = vmor %vm325, %vm401
      %vm434 = vmor %vm324, %vm402
      %vm435 = vmor %vm325, %vm403
      %vm436 = vmor %vm324, %vm404
      %vm437 = vmor %vm325, %vm405
      %v438 = vadd.s32 %v305, 20
      %v439 = vadd.s32 %v306, 20
      %v440 = vadd.s32 %v307, 20
      %v441 = vadd.s32 %v308, 20
      %v442 = vadd.s32 %v309, 20
      %v443 = vadd.s32 %v310, 20
      %v444 = vadd.s32 %v311, 20
      %v445 = vadd.s32 %v312, 20
      %v446 = vadd.s32 %v313, 20
      %v447 = vadd.s32 %v314, 20
      %v448 = vadd.s32 %v315, 20
      %v449 = vadd.s32 %v316, 20
      %v450 = vadd.s32 %v317, 20
      %v451 = vadd.s32 %v318, 20
      %v452 = vadd.s32 %v319, 20
      %v453 = vadd.s32 %v320, 20
      %454 = vset.pattern.permute.xlu0 1
      %455 = vperm.xlu0 %454, %v438
      %v456 = vpop.permute.xlu0 %455
      %457 = vset.pattern.permute.xlu0 1
      %458 = vperm.xlu0 %457, %v439
      %v459 = vpop.permute.xlu0 %458
      %460 = vset.pattern.permute.xlu0 1
      %461 = vperm.xlu0 %460, %v440
      %v462 = vpop.permute.xlu0 %461
      %463 = vset.pattern.permute.xlu0 1
      %464 = vperm.xlu0 %463, %v441
      %v465 = vpop.permute.xlu0 %464
      %466 = vset.pattern.permute.xlu0 1
      %467 = vperm.xlu0 %466, %v442
      %v468 = vpop.permute.xlu0 %467
      %469 = vset.pattern.permute.xlu0 1
      %470 = vperm.xlu0 %469, %v443
      %v471 = vpop.permute.xlu0 %470
      %472 = vset.pattern.permute.xlu0 1
      %473 = vperm.xlu0 %472, %v444
      %v474 = vpop.permute.xlu0 %473
      %475 = vset.pattern.permute.xlu0 1
      %476 = vperm.xlu0 %475, %v445
      %v477 = vpop.permute.xlu0 %476
      %478 = vset.pattern.permute.xlu0 1
      %479 = vperm.xlu0 %478, %v446
      %v480 = vpop.permute.xlu0 %479
      %481 = vset.pattern.permute.xlu0 1
      %482 = vperm.xlu0 %481, %v447
      %v483 = vpop.permute.xlu0 %482
      %484 = vset.pattern.permute.xlu0 1
      %485 = vperm.xlu0 %484, %v448
      %v486 = vpop.permute.xlu0 %485
      %487 = vset.pattern.permute.xlu0 1
      %488 = vperm.xlu0 %487, %v449
      %v489 = vpop.permute.xlu0 %488
      %490 = vset.pattern.permute.xlu0 1
      %491 = vperm.xlu0 %490, %v450
      %v492 = vpop.permute.xlu0 %491
      %493 = vset.pattern.permute.xlu0 1
      %494 = vperm.xlu0 %493, %v451
      %v495 = vpop.permute.xlu0 %494
      %496 = vset.pattern.permute.xlu0 1
      %497 = vperm.xlu0 %496, %v452
      %v498 = vpop.permute.xlu0 %497
      %499 = vset.pattern.permute.xlu0 1
      %500 = vperm.xlu0 %499, %v453
      %v501 = vpop.permute.xlu0 %500
      %vm502 = vcmp.eq.s32.totalorder %v322, %v456
      %vm503 = vcmp.eq.s32.totalorder %v323, %v456
      %vm504 = vcmp.eq.s32.totalorder %v322, %v459
      %vm505 = vcmp.eq.s32.totalorder %v323, %v459
      %vm506 = vcmp.eq.s32.totalorder %v322, %v462
      %vm507 = vcmp.eq.s32.totalorder %v323, %v462
      %vm508 = vcmp.eq.s32.totalorder %v322, %v465
      %vm509 = vcmp.eq.s32.totalorder %v323, %v465
      %vm510 = vcmp.eq.s32.totalorder %v322, %v468
      %vm511 = vcmp.eq.s32.totalorder %v323, %v468
      %vm512 = vcmp.eq.s32.totalorder %v322, %v471
      %vm513 = vcmp.eq.s32.totalorder %v323, %v471
      %vm514 = vcmp.eq.s32.totalorder %v322, %v474
      %vm515 = vcmp.eq.s32.totalorder %v323, %v474
      %vm516 = vcmp.eq.s32.totalorder %v322, %v477
      %vm517 = vcmp.eq.s32.totalorder %v323, %v477
      %vm518 = vcmp.eq.s32.totalorder %v322, %v480
      %vm519 = vcmp.eq.s32.totalorder %v323, %v480
      %vm520 = vcmp.eq.s32.totalorder %v322, %v483
      %vm521 = vcmp.eq.s32.totalorder %v323, %v483
      %vm522 = vcmp.eq.s32.totalorder %v322, %v486
      %vm523 = vcmp.eq.s32.totalorder %v323, %v486
      %vm524 = vcmp.eq.s32.totalorder %v322, %v489
      %vm525 = vcmp.eq.s32.totalorder %v323, %v489
      %vm526 = vcmp.eq.s32.totalorder %v322, %v492
      %vm527 = vcmp.eq.s32.totalorder %v323, %v492
      %vm528 = vcmp.eq.s32.totalorder %v322, %v495
      %vm529 = vcmp.eq.s32.totalorder %v323, %v495
      %vm530 = vcmp.eq.s32.totalorder %v322, %v498
      %vm531 = vcmp.eq.s32.totalorder %v323, %v498
      %vm532 = vcmp.eq.s32.totalorder %v322, %v501
      %vm533 = vcmp.eq.s32.totalorder %v323, %v501
      %vm534 = vmor %vm406, %vm502
      %vm535 = vmor %vm407, %vm503
      %vm536 = vmor %vm408, %vm504
      %vm537 = vmor %vm409, %vm505
      %vm538 = vmor %vm410, %vm506
      %vm539 = vmor %vm411, %vm507
      %vm540 = vmor %vm412, %vm508
      %vm541 = vmor %vm413, %vm509
      %vm542 = vmor %vm414, %vm510
      %vm543 = vmor %vm415, %vm511
      %vm544 = vmor %vm416, %vm512
      %vm545 = vmor %vm417, %vm513
      %vm546 = vmor %vm418, %vm514
      %vm547 = vmor %vm419, %vm515
      %vm548 = vmor %vm420, %vm516
      %vm549 = vmor %vm421, %vm517
      %vm550 = vmor %vm422, %vm518
      %vm551 = vmor %vm423, %vm519
      %vm552 = vmor %vm424, %vm520
      %vm553 = vmor %vm425, %vm521
      %vm554 = vmor %vm426, %vm522
      %vm555 = vmor %vm427, %vm523
      %vm556 = vmor %vm428, %vm524
      %vm557 = vmor %vm429, %vm525
      %vm558 = vmor %vm430, %vm526
      %vm559 = vmor %vm431, %vm527
      %vm560 = vmor %vm432, %vm528
      %vm561 = vmor %vm433, %vm529
      %vm562 = vmor %vm434, %vm530
      %vm563 = vmor %vm435, %vm531
      %vm564 = vmor %vm436, %vm532
      %vm565 = vmor %vm437, %vm533
      %v566 = vadd.s32 %v305, 40
      %v567 = vadd.s32 %v306, 40
      %v568 = vadd.s32 %v307, 40
      %v569 = vadd.s32 %v308, 40
      %v570 = vadd.s32 %v309, 40
      %v571 = vadd.s32 %v310, 40
      %v572 = vadd.s32 %v311, 40
      %v573 = vadd.s32 %v312, 40
      %v574 = vadd.s32 %v313, 40
      %v575 = vadd.s32 %v314, 40
      %v576 = vadd.s32 %v315, 40
      %v577 = vadd.s32 %v316, 40
      %v578 = vadd.s32 %v317, 40
      %v579 = vadd.s32 %v318, 40
      %v580 = vadd.s32 %v319, 40
      %v581 = vadd.s32 %v320, 40
      %582 = vset.pattern.permute.xlu0 2
      %583 = vperm.xlu0 %582, %v566
      %v584 = vpop.permute.xlu0 %583
      %585 = vset.pattern.permute.xlu0 2
      %586 = vperm.xlu0 %585, %v567
      %v587 = vpop.permute.xlu0 %586
      %588 = vset.pattern.permute.xlu0 2
      %589 = vperm.xlu0 %588, %v568
      %v590 = vpop.permute.xlu0 %589
      %591 = vset.pattern.permute.xlu0 2
      %592 = vperm.xlu0 %591, %v569
      %v593 = vpop.permute.xlu0 %592
      %594 = vset.pattern.permute.xlu0 2
      %595 = vperm.xlu0 %594, %v570
      %v596 = vpop.permute.xlu0 %595
      %597 = vset.pattern.permute.xlu0 2
      %598 = vperm.xlu0 %597, %v571
      %v599 = vpop.permute.xlu0 %598
      %600 = vset.pattern.permute.xlu0 2
      %601 = vperm.xlu0 %600, %v572
      %v602 = vpop.permute.xlu0 %601
      %603 = vset.pattern.permute.xlu0 2
      %604 = vperm.xlu0 %603, %v573
      %v605 = vpop.permute.xlu0 %604
      %606 = vset.pattern.permute.xlu0 2
      %607 = vperm.xlu0 %606, %v574
      %v608 = vpop.permute.xlu0 %607
      %609 = vset.pattern.permute.xlu0 2
      %610 = vperm.xlu0 %609, %v575
      %v611 = vpop.permute.xlu0 %610
      %612 = vset.pattern.permute.xlu0 2
      %613 = vperm.xlu0 %612, %v576
      %v614 = vpop.permute.xlu0 %613
      %615 = vset.pattern.permute.xlu0 2
      %616 = vperm.xlu0 %615, %v577
      %v617 = vpop.permute.xlu0 %616
      %618 = vset.pattern.permute.xlu0 2
      %619 = vperm.xlu0 %618, %v578
      %v620 = vpop.permute.xlu0 %619
      %621 = vset.pattern.permute.xlu0 2
      %622 = vperm.xlu0 %621, %v579
      %v623 = vpop.permute.xlu0 %622
      %624 = vset.pattern.permute.xlu0 2
      %625 = vperm.xlu0 %624, %v580
      %v626 = vpop.permute.xlu0 %625
      %627 = vset.pattern.permute.xlu0 2
      %628 = vperm.xlu0 %627, %v581
      %v629 = vpop.permute.xlu0 %628
      %vm630 = vcmp.eq.s32.totalorder %v322, %v584
      %vm631 = vcmp.eq.s32.totalorder %v323, %v584
      %vm632 = vcmp.eq.s32.totalorder %v322, %v587
      %vm633 = vcmp.eq.s32.totalorder %v323, %v587
      %vm634 = vcmp.eq.s32.totalorder %v322, %v590
      %vm635 = vcmp.eq.s32.totalorder %v323, %v590
      %vm636 = vcmp.eq.s32.totalorder %v322, %v593
      %vm637 = vcmp.eq.s32.totalorder %v323, %v593
      %vm638 = vcmp.eq.s32.totalorder %v322, %v596
      %vm639 = vcmp.eq.s32.totalorder %v323, %v596
      %vm640 = vcmp.eq.s32.totalorder %v322, %v599
      %vm641 = vcmp.eq.s32.totalorder %v323, %v599
      %vm642 = vcmp.eq.s32.totalorder %v322, %v602
      %vm643 = vcmp.eq.s32.totalorder %v323, %v602
      %vm644 = vcmp.eq.s32.totalorder %v322, %v605
      %vm645 = vcmp.eq.s32.totalorder %v323, %v605
      %vm646 = vcmp.eq.s32.totalorder %v322, %v608
      %vm647 = vcmp.eq.s32.totalorder %v323, %v608
      %vm648 = vcmp.eq.s32.totalorder %v322, %v611
      %vm649 = vcmp.eq.s32.totalorder %v323, %v611
      %vm650 = vcmp.eq.s32.totalorder %v322, %v614
      %vm651 = vcmp.eq.s32.totalorder %v323, %v614
      %vm652 = vcmp.eq.s32.totalorder %v322, %v617
      %vm653 = vcmp.eq.s32.totalorder %v323, %v617
      %vm654 = vcmp.eq.s32.totalorder %v322, %v620
      %vm655 = vcmp.eq.s32.totalorder %v323, %v620
      %vm656 = vcmp.eq.s32.totalorder %v322, %v623
      %vm657 = vcmp.eq.s32.totalorder %v323, %v623
      %vm658 = vcmp.eq.s32.totalorder %v322, %v626
      %vm659 = vcmp.eq.s32.totalorder %v323, %v626
      %vm660 = vcmp.eq.s32.totalorder %v322, %v629
      %vm661 = vcmp.eq.s32.totalorder %v323, %v629
      %vm662 = vmor %vm534, %vm630
      %vm663 = vmor %vm535, %vm631
      %vm664 = vmor %vm536, %vm632
      %vm665 = vmor %vm537, %vm633
      %vm666 = vmor %vm538, %vm634
      %vm667 = vmor %vm539, %vm635
      %vm668 = vmor %vm540, %vm636
      %vm669 = vmor %vm541, %vm637
      %vm670 = vmor %vm542, %vm638
      %vm671 = vmor %vm543, %vm639
      %vm672 = vmor %vm544, %vm640
      %vm673 = vmor %vm545, %vm641
      %vm674 = vmor %vm546, %vm642
      %vm675 = vmor %vm547, %vm643
      %vm676 = vmor %vm548, %vm644
      %vm677 = vmor %vm549, %vm645
      %vm678 = vmor %vm550, %vm646
      %vm679 = vmor %vm551, %vm647
      %vm680 = vmor %vm552, %vm648
      %vm681 = vmor %vm553, %vm649
      %vm682 = vmor %vm554, %vm650
      %vm683 = vmor %vm555, %vm651
      %vm684 = vmor %vm556, %vm652
      %vm685 = vmor %vm557, %vm653
      %vm686 = vmor %vm558, %vm654
      %vm687 = vmor %vm559, %vm655
      %vm688 = vmor %vm560, %vm656
      %vm689 = vmor %vm561, %vm657
      %vm690 = vmor %vm562, %vm658
      %vm691 = vmor %vm563, %vm659
      %vm692 = vmor %vm564, %vm660
      %vm693 = vmor %vm565, %vm661
      %v694 = vadd.s32 %v305, 60
      %v695 = vadd.s32 %v306, 60
      %v696 = vadd.s32 %v307, 60
      %v697 = vadd.s32 %v308, 60
      %v698 = vadd.s32 %v309, 60
      %v699 = vadd.s32 %v310, 60
      %v700 = vadd.s32 %v311, 60
      %v701 = vadd.s32 %v312, 60
      %v702 = vadd.s32 %v313, 60
      %v703 = vadd.s32 %v314, 60
      %v704 = vadd.s32 %v315, 60
      %v705 = vadd.s32 %v316, 60
      %v706 = vadd.s32 %v317, 60
      %v707 = vadd.s32 %v318, 60
      %v708 = vadd.s32 %v319, 60
      %v709 = vadd.s32 %v320, 60
      %710 = vset.pattern.permute.xlu0 3
      %711 = vperm.xlu0 %710, %v694
      %v712 = vpop.permute.xlu0 %711
      %713 = vset.pattern.permute.xlu0 3
      %714 = vperm.xlu0 %713, %v695
      %v715 = vpop.permute.xlu0 %714
      %716 = vset.pattern.permute.xlu0 3
      %717 = vperm.xlu0 %716, %v696
      %v718 = vpop.permute.xlu0 %717
      %719 = vset.pattern.permute.xlu0 3
      %720 = vperm.xlu0 %719, %v697
      %v721 = vpop.permute.xlu0 %720
      %722 = vset.pattern.permute.xlu0 3
      %723 = vperm.xlu0 %722, %v698
      %v724 = vpop.permute.xlu0 %723
      %725 = vset.pattern.permute.xlu0 3
      %726 = vperm.xlu0 %725, %v699
      %v727 = vpop.permute.xlu0 %726
      %728 = vset.pattern.permute.xlu0 3
      %729 = vperm.xlu0 %728, %v700
      %v730 = vpop.permute.xlu0 %729
      %731 = vset.pattern.permute.xlu0 3
      %732 = vperm.xlu0 %731, %v701
      %v733 = vpop.permute.xlu0 %732
      %734 = vset.pattern.permute.xlu0 3
      %735 = vperm.xlu0 %734, %v702
      %v736 = vpop.permute.xlu0 %735
      %737 = vset.pattern.permute.xlu0 3
      %738 = vperm.xlu0 %737, %v703
      %v739 = vpop.permute.xlu0 %738
      %740 = vset.pattern.permute.xlu0 3
      %741 = vperm.xlu0 %740, %v704
      %v742 = vpop.permute.xlu0 %741
      %743 = vset.pattern.permute.xlu0 3
      %744 = vperm.xlu0 %743, %v705
      %v745 = vpop.permute.xlu0 %744
      %746 = vset.pattern.permute.xlu0 3
      %747 = vperm.xlu0 %746, %v706
      %v748 = vpop.permute.xlu0 %747
      %749 = vset.pattern.permute.xlu0 3
      %750 = vperm.xlu0 %749, %v707
      %v751 = vpop.permute.xlu0 %750
      %752 = vset.pattern.permute.xlu0 3
      %753 = vperm.xlu0 %752, %v708
      %v754 = vpop.permute.xlu0 %753
      %755 = vset.pattern.permute.xlu0 3
      %756 = vperm.xlu0 %755, %v709
      %v757 = vpop.permute.xlu0 %756
      %vm758 = vcmp.eq.s32.totalorder %v322, %v712
      %vm759 = vcmp.eq.s32.totalorder %v323, %v712
      %vm760 = vcmp.eq.s32.totalorder %v322, %v715
      %vm761 = vcmp.eq.s32.totalorder %v323, %v715
      %vm762 = vcmp.eq.s32.totalorder %v322, %v718
      %vm763 = vcmp.eq.s32.totalorder %v323, %v718
      %vm764 = vcmp.eq.s32.totalorder %v322, %v721
      %vm765 = vcmp.eq.s32.totalorder %v323, %v721
      %vm766 = vcmp.eq.s32.totalorder %v322, %v724
      %vm767 = vcmp.eq.s32.totalorder %v323, %v724
      %vm768 = vcmp.eq.s32.totalorder %v322, %v727
      %vm769 = vcmp.eq.s32.totalorder %v323, %v727
      %vm770 = vcmp.eq.s32.totalorder %v322, %v730
      %vm771 = vcmp.eq.s32.totalorder %v323, %v730
      %vm772 = vcmp.eq.s32.totalorder %v322, %v733
      %vm773 = vcmp.eq.s32.totalorder %v323, %v733
      %vm774 = vcmp.eq.s32.totalorder %v322, %v736
      %vm775 = vcmp.eq.s32.totalorder %v323, %v736
      %vm776 = vcmp.eq.s32.totalorder %v322, %v739
      %vm777 = vcmp.eq.s32.totalorder %v323, %v739
      %vm778 = vcmp.eq.s32.totalorder %v322, %v742
      %vm779 = vcmp.eq.s32.totalorder %v323, %v742
      %vm780 = vcmp.eq.s32.totalorder %v322, %v745
      %vm781 = vcmp.eq.s32.totalorder %v323, %v745
      %vm782 = vcmp.eq.s32.totalorder %v322, %v748
      %vm783 = vcmp.eq.s32.totalorder %v323, %v748
      %vm784 = vcmp.eq.s32.totalorder %v322, %v751
      %vm785 = vcmp.eq.s32.totalorder %v323, %v751
      %vm786 = vcmp.eq.s32.totalorder %v322, %v754
      %vm787 = vcmp.eq.s32.totalorder %v323, %v754
      %vm788 = vcmp.eq.s32.totalorder %v322, %v757
      %vm789 = vcmp.eq.s32.totalorder %v323, %v757
      %vm790 = vmor %vm662, %vm758
      %vm791 = vmor %vm663, %vm759
      %vm792 = vmor %vm664, %vm760
      %vm793 = vmor %vm665, %vm761
      %vm794 = vmor %vm666, %vm762
      %vm795 = vmor %vm667, %vm763
      %vm796 = vmor %vm668, %vm764
      %vm797 = vmor %vm669, %vm765
      %vm798 = vmor %vm670, %vm766
      %vm799 = vmor %vm671, %vm767
      %vm800 = vmor %vm672, %vm768
      %vm801 = vmor %vm673, %vm769
      %vm802 = vmor %vm674, %vm770
      %vm803 = vmor %vm675, %vm771
      %vm804 = vmor %vm676, %vm772
      %vm805 = vmor %vm677, %vm773
      %vm806 = vmor %vm678, %vm774
      %vm807 = vmor %vm679, %vm775
      %vm808 = vmor %vm680, %vm776
      %vm809 = vmor %vm681, %vm777
      %vm810 = vmor %vm682, %vm778
      %vm811 = vmor %vm683, %vm779
      %vm812 = vmor %vm684, %vm780
      %vm813 = vmor %vm685, %vm781
      %vm814 = vmor %vm686, %vm782
      %vm815 = vmor %vm687, %vm783
      %vm816 = vmor %vm688, %vm784
      %vm817 = vmor %vm689, %vm785
      %vm818 = vmor %vm690, %vm786
      %vm819 = vmor %vm691, %vm787
      %vm820 = vmor %vm692, %vm788
      %vm821 = vmor %vm693, %vm789
      %v822 = vadd.s32 %v305, 80
      %v823 = vadd.s32 %v306, 80
      %v824 = vadd.s32 %v307, 80
      %v825 = vadd.s32 %v308, 80
      %v826 = vadd.s32 %v309, 80
      %v827 = vadd.s32 %v310, 80
      %v828 = vadd.s32 %v311, 80
      %v829 = vadd.s32 %v312, 80
      %v830 = vadd.s32 %v313, 80
      %v831 = vadd.s32 %v314, 80
      %v832 = vadd.s32 %v315, 80
      %v833 = vadd.s32 %v316, 80
      %v834 = vadd.s32 %v317, 80
      %v835 = vadd.s32 %v318, 80
      %v836 = vadd.s32 %v319, 80
      %v837 = vadd.s32 %v320, 80
      %838 = vset.pattern.permute.xlu0 4
      %839 = vperm.xlu0 %838, %v822
      %v840 = vpop.permute.xlu0 %839
      %841 = vset.pattern.permute.xlu0 4
      %842 = vperm.xlu0 %841, %v823
      %v843 = vpop.permute.xlu0 %842
      %844 = vset.pattern.permute.xlu0 4
      %845 = vperm.xlu0 %844, %v824
      %v846 = vpop.permute.xlu0 %845
      %847 = vset.pattern.permute.xlu0 4
      %848 = vperm.xlu0 %847, %v825
      %v849 = vpop.permute.xlu0 %848
      %850 = vset.pattern.permute.xlu0 4
      %851 = vperm.xlu0 %850, %v826
      %v852 = vpop.permute.xlu0 %851
      %853 = vset.pattern.permute.xlu0 4
      %854 = vperm.xlu0 %853, %v827
      %v855 = vpop.permute.xlu0 %854
      %856 = vset.pattern.permute.xlu0 4
      %857 = vperm.xlu0 %856, %v828
      %v858 = vpop.permute.xlu0 %857
      %859 = vset.pattern.permute.xlu0 4
      %860 = vperm.xlu0 %859, %v829
      %v861 = vpop.permute.xlu0 %860
      %862 = vset.pattern.permute.xlu0 4
      %863 = vperm.xlu0 %862, %v830
      %v864 = vpop.permute.xlu0 %863
      %865 = vset.pattern.permute.xlu0 4
      %866 = vperm.xlu0 %865, %v831
      %v867 = vpop.permute.xlu0 %866
      %868 = vset.pattern.permute.xlu0 4
      %869 = vperm.xlu0 %868, %v832
      %v870 = vpop.permute.xlu0 %869
      %871 = vset.pattern.permute.xlu0 4
      %872 = vperm.xlu0 %871, %v833
      %v873 = vpop.permute.xlu0 %872
      %874 = vset.pattern.permute.xlu0 4
      %875 = vperm.xlu0 %874, %v834
      %v876 = vpop.permute.xlu0 %875
      %877 = vset.pattern.permute.xlu0 4
      %878 = vperm.xlu0 %877, %v835
      %v879 = vpop.permute.xlu0 %878
      %880 = vset.pattern.permute.xlu0 4
      %881 = vperm.xlu0 %880, %v836
      %v882 = vpop.permute.xlu0 %881
      %883 = vset.pattern.permute.xlu0 4
      %884 = vperm.xlu0 %883, %v837
      %v885 = vpop.permute.xlu0 %884
      %vm886 = vcmp.eq.s32.totalorder %v322, %v840
      %vm887 = vcmp.eq.s32.totalorder %v323, %v840
      %vm888 = vcmp.eq.s32.totalorder %v322, %v843
      %vm889 = vcmp.eq.s32.totalorder %v323, %v843
      %vm890 = vcmp.eq.s32.totalorder %v322, %v846
      %vm891 = vcmp.eq.s32.totalorder %v323, %v846
      %vm892 = vcmp.eq.s32.totalorder %v322, %v849
      %vm893 = vcmp.eq.s32.totalorder %v323, %v849
      %vm894 = vcmp.eq.s32.totalorder %v322, %v852
      %vm895 = vcmp.eq.s32.totalorder %v323, %v852
      %vm896 = vcmp.eq.s32.totalorder %v322, %v855
      %vm897 = vcmp.eq.s32.totalorder %v323, %v855
      %vm898 = vcmp.eq.s32.totalorder %v322, %v858
      %vm899 = vcmp.eq.s32.totalorder %v323, %v858
      %vm900 = vcmp.eq.s32.totalorder %v322, %v861
      %vm901 = vcmp.eq.s32.totalorder %v323, %v861
      %vm902 = vcmp.eq.s32.totalorder %v322, %v864
      %vm903 = vcmp.eq.s32.totalorder %v323, %v864
      %vm904 = vcmp.eq.s32.totalorder %v322, %v867
      %vm905 = vcmp.eq.s32.totalorder %v323, %v867
      %vm906 = vcmp.eq.s32.totalorder %v322, %v870
      %vm907 = vcmp.eq.s32.totalorder %v323, %v870
      %vm908 = vcmp.eq.s32.totalorder %v322, %v873
      %vm909 = vcmp.eq.s32.totalorder %v323, %v873
      %vm910 = vcmp.eq.s32.totalorder %v322, %v876
      %vm911 = vcmp.eq.s32.totalorder %v323, %v876
      %vm912 = vcmp.eq.s32.totalorder %v322, %v879
      %vm913 = vcmp.eq.s32.totalorder %v323, %v879
      %vm914 = vcmp.eq.s32.totalorder %v322, %v882
      %vm915 = vcmp.eq.s32.totalorder %v323, %v882
      %vm916 = vcmp.eq.s32.totalorder %v322, %v885
      %vm917 = vcmp.eq.s32.totalorder %v323, %v885
      %vm918 = vmor %vm790, %vm886
      %vm919 = vmor %vm791, %vm887
      %vm920 = vmor %vm792, %vm888
      %vm921 = vmor %vm793, %vm889
      %vm922 = vmor %vm794, %vm890
      %vm923 = vmor %vm795, %vm891
      %vm924 = vmor %vm796, %vm892
      %vm925 = vmor %vm797, %vm893
      %vm926 = vmor %vm798, %vm894
      %vm927 = vmor %vm799, %vm895
      %vm928 = vmor %vm800, %vm896
      %vm929 = vmor %vm801, %vm897
      %vm930 = vmor %vm802, %vm898
      %vm931 = vmor %vm803, %vm899
      %vm932 = vmor %vm804, %vm900
      %vm933 = vmor %vm805, %vm901
      %vm934 = vmor %vm806, %vm902
      %vm935 = vmor %vm807, %vm903
      %vm936 = vmor %vm808, %vm904
      %vm937 = vmor %vm809, %vm905
      %vm938 = vmor %vm810, %vm906
      %vm939 = vmor %vm811, %vm907
      %vm940 = vmor %vm812, %vm908
      %vm941 = vmor %vm813, %vm909
      %vm942 = vmor %vm814, %vm910
      %vm943 = vmor %vm815, %vm911
      %vm944 = vmor %vm816, %vm912
      %vm945 = vmor %vm817, %vm913
      %vm946 = vmor %vm818, %vm914
      %vm947 = vmor %vm819, %vm915
      %vm948 = vmor %vm820, %vm916
      %vm949 = vmor %vm821, %vm917
      %v950 = vadd.s32 %v305, 100
      %v951 = vadd.s32 %v306, 100
      %v952 = vadd.s32 %v307, 100
      %v953 = vadd.s32 %v308, 100
      %v954 = vadd.s32 %v309, 100
      %v955 = vadd.s32 %v310, 100
      %v956 = vadd.s32 %v311, 100
      %v957 = vadd.s32 %v312, 100
      %v958 = vadd.s32 %v313, 100
      %v959 = vadd.s32 %v314, 100
      %v960 = vadd.s32 %v315, 100
      %v961 = vadd.s32 %v316, 100
      %v962 = vadd.s32 %v317, 100
      %v963 = vadd.s32 %v318, 100
      %v964 = vadd.s32 %v319, 100
      %v965 = vadd.s32 %v320, 100
      %966 = vset.pattern.permute.xlu0 5
      %967 = vperm.xlu0 %966, %v950
      %v968 = vpop.permute.xlu0 %967
      %969 = vset.pattern.permute.xlu0 5
      %970 = vperm.xlu0 %969, %v951
      %v971 = vpop.permute.xlu0 %970
      %972 = vset.pattern.permute.xlu0 5
      %973 = vperm.xlu0 %972, %v952
      %v974 = vpop.permute.xlu0 %973
      %975 = vset.pattern.permute.xlu0 5
      %976 = vperm.xlu0 %975, %v953
      %v977 = vpop.permute.xlu0 %976
      %978 = vset.pattern.permute.xlu0 5
      %979 = vperm.xlu0 %978, %v954
      %v980 = vpop.permute.xlu0 %979
      %981 = vset.pattern.permute.xlu0 5
      %982 = vperm.xlu0 %981, %v955
      %v983 = vpop.permute.xlu0 %982
      %984 = vset.pattern.permute.xlu0 5
      %985 = vperm.xlu0 %984, %v956
      %v986 = vpop.permute.xlu0 %985
      %987 = vset.pattern.permute.xlu0 5
      %988 = vperm.xlu0 %987, %v957
      %v989 = vpop.permute.xlu0 %988
      %990 = vset.pattern.permute.xlu0 5
      %991 = vperm.xlu0 %990, %v958
      %v992 = vpop.permute.xlu0 %991
      %993 = vset.pattern.permute.xlu0 5
      %994 = vperm.xlu0 %993, %v959
      %v995 = vpop.permute.xlu0 %994
      %996 = vset.pattern.permute.xlu0 5
      %997 = vperm.xlu0 %996, %v960
      %v998 = vpop.permute.xlu0 %997
      %999 = vset.pattern.permute.xlu0 5
      %1000 = vperm.xlu0 %999, %v961
      %v1001 = vpop.permute.xlu0 %1000
      %1002 = vset.pattern.permute.xlu0 5
      %1003 = vperm.xlu0 %1002, %v962
      %v1004 = vpop.permute.xlu0 %1003
      %1005 = vset.pattern.permute.xlu0 5
      %1006 = vperm.xlu0 %1005, %v963
      %v1007 = vpop.permute.xlu0 %1006
      %1008 = vset.pattern.permute.xlu0 5
      %1009 = vperm.xlu0 %1008, %v964
      %v1010 = vpop.permute.xlu0 %1009
      %1011 = vset.pattern.permute.xlu0 5
      %1012 = vperm.xlu0 %1011, %v965
      %v1013 = vpop.permute.xlu0 %1012
      %vm1014 = vcmp.eq.s32.totalorder %v322, %v968
      %vm1015 = vcmp.eq.s32.totalorder %v323, %v968
      %vm1016 = vcmp.eq.s32.totalorder %v322, %v971
      %vm1017 = vcmp.eq.s32.totalorder %v323, %v971
      %vm1018 = vcmp.eq.s32.totalorder %v322, %v974
      %vm1019 = vcmp.eq.s32.totalorder %v323, %v974
      %vm1020 = vcmp.eq.s32.totalorder %v322, %v977
      %vm1021 = vcmp.eq.s32.totalorder %v323, %v977
      %vm1022 = vcmp.eq.s32.totalorder %v322, %v980
      %vm1023 = vcmp.eq.s32.totalorder %v323, %v980
      %vm1024 = vcmp.eq.s32.totalorder %v322, %v983
      %vm1025 = vcmp.eq.s32.totalorder %v323, %v983
      %vm1026 = vcmp.eq.s32.totalorder %v322, %v986
      %vm1027 = vcmp.eq.s32.totalorder %v323, %v986
      %vm1028 = vcmp.eq.s32.totalorder %v322, %v989
      %vm1029 = vcmp.eq.s32.totalorder %v323, %v989
      %vm1030 = vcmp.eq.s32.totalorder %v322, %v992
      %vm1031 = vcmp.eq.s32.totalorder %v323, %v992
      %vm1032 = vcmp.eq.s32.totalorder %v322, %v995
      %vm1033 = vcmp.eq.s32.totalorder %v323, %v995
      %vm1034 = vcmp.eq.s32.totalorder %v322, %v998
      %vm1035 = vcmp.eq.s32.totalorder %v323, %v998
      %vm1036 = vcmp.eq.s32.totalorder %v322, %v1001
      %vm1037 = vcmp.eq.s32.totalorder %v323, %v1001
      %vm1038 = vcmp.eq.s32.totalorder %v322, %v1004
      %vm1039 = vcmp.eq.s32.totalorder %v323, %v1004
      %vm1040 = vcmp.eq.s32.totalorder %v322, %v1007
      %vm1041 = vcmp.eq.s32.totalorder %v323, %v1007
      %vm1042 = vcmp.eq.s32.totalorder %v322, %v1010
      %vm1043 = vcmp.eq.s32.totalorder %v323, %v1010
      %vm1044 = vcmp.eq.s32.totalorder %v322, %v1013
      %vm1045 = vcmp.eq.s32.totalorder %v323, %v1013
      %vm1046 = vmor %vm918, %vm1014
      %vm1047 = vmor %vm919, %vm1015
      %vm1048 = vmor %vm920, %vm1016
      %vm1049 = vmor %vm921, %vm1017
      %vm1050 = vmor %vm922, %vm1018
      %vm1051 = vmor %vm923, %vm1019
      %vm1052 = vmor %vm924, %vm1020
      %vm1053 = vmor %vm925, %vm1021
      %vm1054 = vmor %vm926, %vm1022
      %vm1055 = vmor %vm927, %vm1023
      %vm1056 = vmor %vm928, %vm1024
      %vm1057 = vmor %vm929, %vm1025
      %vm1058 = vmor %vm930, %vm1026
      %vm1059 = vmor %vm931, %vm1027
      %vm1060 = vmor %vm932, %vm1028
      %vm1061 = vmor %vm933, %vm1029
      %vm1062 = vmor %vm934, %vm1030
      %vm1063 = vmor %vm935, %vm1031
      %vm1064 = vmor %vm936, %vm1032
      %vm1065 = vmor %vm937, %vm1033
      %vm1066 = vmor %vm938, %vm1034
      %vm1067 = vmor %vm939, %vm1035
      %vm1068 = vmor %vm940, %vm1036
      %vm1069 = vmor %vm941, %vm1037
      %vm1070 = vmor %vm942, %vm1038
      %vm1071 = vmor %vm943, %vm1039
      %vm1072 = vmor %vm944, %vm1040
      %vm1073 = vmor %vm945, %vm1041
      %vm1074 = vmor %vm946, %vm1042
      %vm1075 = vmor %vm947, %vm1043
      %vm1076 = vmor %vm948, %vm1044
      %vm1077 = vmor %vm949, %vm1045
      %v1078 = vadd.s32 %v305, 120
      %v1079 = vadd.s32 %v306, 120
      %v1080 = vadd.s32 %v307, 120
      %v1081 = vadd.s32 %v308, 120
      %v1082 = vadd.s32 %v309, 120
      %v1083 = vadd.s32 %v310, 120
      %v1084 = vadd.s32 %v311, 120
      %v1085 = vadd.s32 %v312, 120
      %v1086 = vadd.s32 %v313, 120
      %v1087 = vadd.s32 %v314, 120
      %v1088 = vadd.s32 %v315, 120
      %v1089 = vadd.s32 %v316, 120
      %v1090 = vadd.s32 %v317, 120
      %v1091 = vadd.s32 %v318, 120
      %v1092 = vadd.s32 %v319, 120
      %v1093 = vadd.s32 %v320, 120
      %1094 = vset.pattern.permute.xlu0 6
      %1095 = vperm.xlu0 %1094, %v1078
      %v1096 = vpop.permute.xlu0 %1095
      %1097 = vset.pattern.permute.xlu0 6
      %1098 = vperm.xlu0 %1097, %v1079
      %v1099 = vpop.permute.xlu0 %1098
      %1100 = vset.pattern.permute.xlu0 6
      %1101 = vperm.xlu0 %1100, %v1080
      %v1102 = vpop.permute.xlu0 %1101
      %1103 = vset.pattern.permute.xlu0 6
      %1104 = vperm.xlu0 %1103, %v1081
      %v1105 = vpop.permute.xlu0 %1104
      %1106 = vset.pattern.permute.xlu0 6
      %1107 = vperm.xlu0 %1106, %v1082
      %v1108 = vpop.permute.xlu0 %1107
      %1109 = vset.pattern.permute.xlu0 6
      %1110 = vperm.xlu0 %1109, %v1083
      %v1111 = vpop.permute.xlu0 %1110
      %1112 = vset.pattern.permute.xlu0 6
      %1113 = vperm.xlu0 %1112, %v1084
      %v1114 = vpop.permute.xlu0 %1113
      %1115 = vset.pattern.permute.xlu0 6
      %1116 = vperm.xlu0 %1115, %v1085
      %v1117 = vpop.permute.xlu0 %1116
      %1118 = vset.pattern.permute.xlu0 6
      %1119 = vperm.xlu0 %1118, %v1086
      %v1120 = vpop.permute.xlu0 %1119
      %1121 = vset.pattern.permute.xlu0 6
      %1122 = vperm.xlu0 %1121, %v1087
      %v1123 = vpop.permute.xlu0 %1122
      %1124 = vset.pattern.permute.xlu0 6
      %1125 = vperm.xlu0 %1124, %v1088
      %v1126 = vpop.permute.xlu0 %1125
      %1127 = vset.pattern.permute.xlu0 6
      %1128 = vperm.xlu0 %1127, %v1089
      %v1129 = vpop.permute.xlu0 %1128
      %1130 = vset.pattern.permute.xlu0 6
      %1131 = vperm.xlu0 %1130, %v1090
      %v1132 = vpop.permute.xlu0 %1131
      %1133 = vset.pattern.permute.xlu0 6
      %1134 = vperm.xlu0 %1133, %v1091
      %v1135 = vpop.permute.xlu0 %1134
      %1136 = vset.pattern.permute.xlu0 6
      %1137 = vperm.xlu0 %1136, %v1092
      %v1138 = vpop.permute.xlu0 %1137
      %1139 = vset.pattern.permute.xlu0 6
      %1140 = vperm.xlu0 %1139, %v1093
      %v1141 = vpop.permute.xlu0 %1140
      %vm1142 = vcmp.eq.s32.totalorder %v322, %v1096
      %vm1143 = vcmp.eq.s32.totalorder %v323, %v1096
      %vm1144 = vcmp.eq.s32.totalorder %v322, %v1099
      %vm1145 = vcmp.eq.s32.totalorder %v323, %v1099
      %vm1146 = vcmp.eq.s32.totalorder %v322, %v1102
      %vm1147 = vcmp.eq.s32.totalorder %v323, %v1102
      %vm1148 = vcmp.eq.s32.totalorder %v322, %v1105
      %vm1149 = vcmp.eq.s32.totalorder %v323, %v1105
      %vm1150 = vcmp.eq.s32.totalorder %v322, %v1108
      %vm1151 = vcmp.eq.s32.totalorder %v323, %v1108
      %vm1152 = vcmp.eq.s32.totalorder %v322, %v1111
      %vm1153 = vcmp.eq.s32.totalorder %v323, %v1111
      %vm1154 = vcmp.eq.s32.totalorder %v322, %v1114
      %vm1155 = vcmp.eq.s32.totalorder %v323, %v1114
      %vm1156 = vcmp.eq.s32.totalorder %v322, %v1117
      %vm1157 = vcmp.eq.s32.totalorder %v323, %v1117
      %vm1158 = vcmp.eq.s32.totalorder %v322, %v1120
      %vm1159 = vcmp.eq.s32.totalorder %v323, %v1120
      %vm1160 = vcmp.eq.s32.totalorder %v322, %v1123
      %vm1161 = vcmp.eq.s32.totalorder %v323, %v1123
      %vm1162 = vcmp.eq.s32.totalorder %v322, %v1126
      %vm1163 = vcmp.eq.s32.totalorder %v323, %v1126
      %vm1164 = vcmp.eq.s32.totalorder %v322, %v1129
      %vm1165 = vcmp.eq.s32.totalorder %v323, %v1129
      %vm1166 = vcmp.eq.s32.totalorder %v322, %v1132
      %vm1167 = vcmp.eq.s32.totalorder %v323, %v1132
      %vm1168 = vcmp.eq.s32.totalorder %v322, %v1135
      %vm1169 = vcmp.eq.s32.totalorder %v323, %v1135
      %vm1170 = vcmp.eq.s32.totalorder %v322, %v1138
      %vm1171 = vcmp.eq.s32.totalorder %v323, %v1138
      %vm1172 = vcmp.eq.s32.totalorder %v322, %v1141
      %vm1173 = vcmp.eq.s32.totalorder %v323, %v1141
      %vm1174 = vmor %vm1046, %vm1142
      %vm1175 = vmor %vm1047, %vm1143
      %vm1176 = vmor %vm1048, %vm1144
      %vm1177 = vmor %vm1049, %vm1145
      %vm1178 = vmor %vm1050, %vm1146
      %vm1179 = vmor %vm1051, %vm1147
      %vm1180 = vmor %vm1052, %vm1148
      %vm1181 = vmor %vm1053, %vm1149
      %vm1182 = vmor %vm1054, %vm1150
      %vm1183 = vmor %vm1055, %vm1151
      %vm1184 = vmor %vm1056, %vm1152
      %vm1185 = vmor %vm1057, %vm1153
      %vm1186 = vmor %vm1058, %vm1154
      %vm1187 = vmor %vm1059, %vm1155
      %vm1188 = vmor %vm1060, %vm1156
      %vm1189 = vmor %vm1061, %vm1157
      %vm1190 = vmor %vm1062, %vm1158
      %vm1191 = vmor %vm1063, %vm1159
      %vm1192 = vmor %vm1064, %vm1160
      %vm1193 = vmor %vm1065, %vm1161
      %vm1194 = vmor %vm1066, %vm1162
      %vm1195 = vmor %vm1067, %vm1163
      %vm1196 = vmor %vm1068, %vm1164
      %vm1197 = vmor %vm1069, %vm1165
      %vm1198 = vmor %vm1070, %vm1166
      %vm1199 = vmor %vm1071, %vm1167
      %vm1200 = vmor %vm1072, %vm1168
      %vm1201 = vmor %vm1073, %vm1169
      %vm1202 = vmor %vm1074, %vm1170
      %vm1203 = vmor %vm1075, %vm1171
      %vm1204 = vmor %vm1076, %vm1172
      %vm1205 = vmor %vm1077, %vm1173
      %v1206 = vadd.s32 %v305, 140
      %v1207 = vadd.s32 %v306, 140
      %v1208 = vadd.s32 %v307, 140
      %v1209 = vadd.s32 %v308, 140
      %v1210 = vadd.s32 %v309, 140
      %v1211 = vadd.s32 %v310, 140
      %v1212 = vadd.s32 %v311, 140
      %v1213 = vadd.s32 %v312, 140
      %v1214 = vadd.s32 %v313, 140
      %v1215 = vadd.s32 %v314, 140
      %v1216 = vadd.s32 %v315, 140
      %v1217 = vadd.s32 %v316, 140
      %v1218 = vadd.s32 %v317, 140
      %v1219 = vadd.s32 %v318, 140
      %v1220 = vadd.s32 %v319, 140
      %v1221 = vadd.s32 %v320, 140
      %1222 = vset.pattern.permute.xlu0 7
      %1223 = vperm.xlu0 %1222, %v1206
      %v1224 = vpop.permute.xlu0 %1223
      %1225 = vset.pattern.permute.xlu0 7
      %1226 = vperm.xlu0 %1225, %v1207
      %v1227 = vpop.permute.xlu0 %1226
      %1228 = vset.pattern.permute.xlu0 7
      %1229 = vperm.xlu0 %1228, %v1208
      %v1230 = vpop.permute.xlu0 %1229
      %1231 = vset.pattern.permute.xlu0 7
      %1232 = vperm.xlu0 %1231, %v1209
      %v1233 = vpop.permute.xlu0 %1232
      %1234 = vset.pattern.permute.xlu0 7
      %1235 = vperm.xlu0 %1234, %v1210
      %v1236 = vpop.permute.xlu0 %1235
      %1237 = vset.pattern.permute.xlu0 7
      %1238 = vperm.xlu0 %1237, %v1211
      %v1239 = vpop.permute.xlu0 %1238
      %1240 = vset.pattern.permute.xlu0 7
      %1241 = vperm.xlu0 %1240, %v1212
      %v1242 = vpop.permute.xlu0 %1241
      %1243 = vset.pattern.permute.xlu0 7
      %1244 = vperm.xlu0 %1243, %v1213
      %v1245 = vpop.permute.xlu0 %1244
      %1246 = vset.pattern.permute.xlu0 7
      %1247 = vperm.xlu0 %1246, %v1214
      %v1248 = vpop.permute.xlu0 %1247
      %1249 = vset.pattern.permute.xlu0 7
      %1250 = vperm.xlu0 %1249, %v1215
      %v1251 = vpop.permute.xlu0 %1250
      %1252 = vset.pattern.permute.xlu0 7
      %1253 = vperm.xlu0 %1252, %v1216
      %v1254 = vpop.permute.xlu0 %1253
      %1255 = vset.pattern.permute.xlu0 7
      %1256 = vperm.xlu0 %1255, %v1217
      %v1257 = vpop.permute.xlu0 %1256
      %1258 = vset.pattern.permute.xlu0 7
      %1259 = vperm.xlu0 %1258, %v1218
      %v1260 = vpop.permute.xlu0 %1259
      %1261 = vset.pattern.permute.xlu0 7
      %1262 = vperm.xlu0 %1261, %v1219
      %v1263 = vpop.permute.xlu0 %1262
      %1264 = vset.pattern.permute.xlu0 7
      %1265 = vperm.xlu0 %1264, %v1220
      %v1266 = vpop.permute.xlu0 %1265
      %1267 = vset.pattern.permute.xlu0 7
      %1268 = vperm.xlu0 %1267, %v1221
      %v1269 = vpop.permute.xlu0 %1268
      %vm1270 = vcmp.eq.s32.totalorder %v322, %v1224
      %vm1271 = vcmp.eq.s32.totalorder %v323, %v1224
      %vm1272 = vcmp.eq.s32.totalorder %v322, %v1227
      %vm1273 = vcmp.eq.s32.totalorder %v323, %v1227
      %vm1274 = vcmp.eq.s32.totalorder %v322, %v1230
      %vm1275 = vcmp.eq.s32.totalorder %v323, %v1230
      %vm1276 = vcmp.eq.s32.totalorder %v322, %v1233
      %vm1277 = vcmp.eq.s32.totalorder %v323, %v1233
      %vm1278 = vcmp.eq.s32.totalorder %v322, %v1236
      %vm1279 = vcmp.eq.s32.totalorder %v323, %v1236
      %vm1280 = vcmp.eq.s32.totalorder %v322, %v1239
      %vm1281 = vcmp.eq.s32.totalorder %v323, %v1239
      %vm1282 = vcmp.eq.s32.totalorder %v322, %v1242
      %vm1283 = vcmp.eq.s32.totalorder %v323, %v1242
      %vm1284 = vcmp.eq.s32.totalorder %v322, %v1245
      %vm1285 = vcmp.eq.s32.totalorder %v323, %v1245
      %vm1286 = vcmp.eq.s32.totalorder %v322, %v1248
      %vm1287 = vcmp.eq.s32.totalorder %v323, %v1248
      %vm1288 = vcmp.eq.s32.totalorder %v322, %v1251
      %vm1289 = vcmp.eq.s32.totalorder %v323, %v1251
      %vm1290 = vcmp.eq.s32.totalorder %v322, %v1254
      %vm1291 = vcmp.eq.s32.totalorder %v323, %v1254
      %vm1292 = vcmp.eq.s32.totalorder %v322, %v1257
      %vm1293 = vcmp.eq.s32.totalorder %v323, %v1257
      %vm1294 = vcmp.eq.s32.totalorder %v322, %v1260
      %vm1295 = vcmp.eq.s32.totalorder %v323, %v1260
      %vm1296 = vcmp.eq.s32.totalorder %v322, %v1263
      %vm1297 = vcmp.eq.s32.totalorder %v323, %v1263
      %vm1298 = vcmp.eq.s32.totalorder %v322, %v1266
      %vm1299 = vcmp.eq.s32.totalorder %v323, %v1266
      %vm1300 = vcmp.eq.s32.totalorder %v322, %v1269
      %vm1301 = vcmp.eq.s32.totalorder %v323, %v1269
      %vm1302 = vmor %vm1174, %vm1270
      %vm1303 = vmor %vm1175, %vm1271
      %vm1304 = vmor %vm1176, %vm1272
      %vm1305 = vmor %vm1177, %vm1273
      %vm1306 = vmor %vm1178, %vm1274
      %vm1307 = vmor %vm1179, %vm1275
      %vm1308 = vmor %vm1180, %vm1276
      %vm1309 = vmor %vm1181, %vm1277
      %vm1310 = vmor %vm1182, %vm1278
      %vm1311 = vmor %vm1183, %vm1279
      %vm1312 = vmor %vm1184, %vm1280
      %vm1313 = vmor %vm1185, %vm1281
      %vm1314 = vmor %vm1186, %vm1282
      %vm1315 = vmor %vm1187, %vm1283
      %vm1316 = vmor %vm1188, %vm1284
      %vm1317 = vmor %vm1189, %vm1285
      %vm1318 = vmor %vm1190, %vm1286
      %vm1319 = vmor %vm1191, %vm1287
      %vm1320 = vmor %vm1192, %vm1288
      %vm1321 = vmor %vm1193, %vm1289
      %vm1322 = vmor %vm1194, %vm1290
      %vm1323 = vmor %vm1195, %vm1291
      %vm1324 = vmor %vm1196, %vm1292
      %vm1325 = vmor %vm1197, %vm1293
      %vm1326 = vmor %vm1198, %vm1294
      %vm1327 = vmor %vm1199, %vm1295
      %vm1328 = vmor %vm1200, %vm1296
      %vm1329 = vmor %vm1201, %vm1297
      %vm1330 = vmor %vm1202, %vm1298
      %vm1331 = vmor %vm1203, %vm1299
      %vm1332 = vmor %vm1204, %vm1300
      %vm1333 = vmor %vm1205, %vm1301
      %v1334 = vsel %vm1302, 1, 0
      %v1335 = vsel %vm1303, 1, 0
      %v1336 = vsel %vm1304, 1, 0
      %v1337 = vsel %vm1305, 1, 0
      %v1338 = vsel %vm1306, 1, 0
      %v1339 = vsel %vm1307, 1, 0
      %v1340 = vsel %vm1308, 1, 0
      %v1341 = vsel %vm1309, 1, 0
      %v1342 = vsel %vm1310, 1, 0
      %v1343 = vsel %vm1311, 1, 0
      %v1344 = vsel %vm1312, 1, 0
      %v1345 = vsel %vm1313, 1, 0
      %v1346 = vsel %vm1314, 1, 0
      %v1347 = vsel %vm1315, 1, 0
      %v1348 = vsel %vm1316, 1, 0
      %v1349 = vsel %vm1317, 1, 0
      %v1350 = vsel %vm1318, 1, 0
      %v1351 = vsel %vm1319, 1, 0
      %v1352 = vsel %vm1320, 1, 0
      %v1353 = vsel %vm1321, 1, 0
      %v1354 = vsel %vm1322, 1, 0
      %v1355 = vsel %vm1323, 1, 0
      %v1356 = vsel %vm1324, 1, 0
      %v1357 = vsel %vm1325, 1, 0
      %v1358 = vsel %vm1326, 1, 0
      %v1359 = vsel %vm1327, 1, 0
      %v1360 = vsel %vm1328, 1, 0
      %v1361 = vsel %vm1329, 1, 0
      %v1362 = vsel %vm1330, 1, 0
      %v1363 = vsel %vm1331, 1, 0
      %v1364 = vsel %vm1332, 1, 0
      %v1365 = vsel %vm1333, 1, 0
      %v1366 = vcvt.s32.f32 %v1334
      %v1367 = vcvt.s32.f32 %v1335
      %v1368 = vcvt.s32.f32 %v1336
      %v1369 = vcvt.s32.f32 %v1337
      %v1370 = vcvt.s32.f32 %v1338
      %v1371 = vcvt.s32.f32 %v1339
      %v1372 = vcvt.s32.f32 %v1340
      %v1373 = vcvt.s32.f32 %v1341
      %v1374 = vcvt.s32.f32 %v1342
      %v1375 = vcvt.s32.f32 %v1343
      %v1376 = vcvt.s32.f32 %v1344
      %v1377 = vcvt.s32.f32 %v1345
      %v1378 = vcvt.s32.f32 %v1346
      %v1379 = vcvt.s32.f32 %v1347
      %v1380 = vcvt.s32.f32 %v1348
      %v1381 = vcvt.s32.f32 %v1349
      %v1382 = vcvt.s32.f32 %v1350
      %v1383 = vcvt.s32.f32 %v1351
      %v1384 = vcvt.s32.f32 %v1352
      %v1385 = vcvt.s32.f32 %v1353
      %v1386 = vcvt.s32.f32 %v1354
      %v1387 = vcvt.s32.f32 %v1355
      %v1388 = vcvt.s32.f32 %v1356
      %v1389 = vcvt.s32.f32 %v1357
      %v1390 = vcvt.s32.f32 %v1358
      %v1391 = vcvt.s32.f32 %v1359
      %v1392 = vcvt.s32.f32 %v1360
      %v1393 = vcvt.s32.f32 %v1361
      %v1394 = vcvt.s32.f32 %v1362
      %v1395 = vcvt.s32.f32 %v1363
      %v1396 = vcvt.s32.f32 %v1364
      %v1397 = vcvt.s32.f32 %v1365
      %v1398 = vpack.c.bf16 %v1368, %v1366
      %v1399 = vpack.c.bf16 %v1369, %v1367
      %v1400 = vpack.c.bf16 %v1372, %v1370
      %v1401 = vpack.c.bf16 %v1373, %v1371
      %v1402 = vpack.c.bf16 %v1376, %v1374
      %v1403 = vpack.c.bf16 %v1377, %v1375
      %v1404 = vpack.c.bf16 %v1380, %v1378
      %v1405 = vpack.c.bf16 %v1381, %v1379
      %v1406 = vpack.c.bf16 %v1384, %v1382
      %v1407 = vpack.c.bf16 %v1385, %v1383
      %v1408 = vpack.c.bf16 %v1388, %v1386
      %v1409 = vpack.c.bf16 %v1389, %v1387
      %v1410 = vpack.c.bf16 %v1392, %v1390
      %v1411 = vpack.c.bf16 %v1393, %v1391
      %v1412 = vpack.c.bf16 %v1396, %v1394
      %v1413 = vpack.c.bf16 %v1397, %v1395
      %v1414 = vld [vmem:[%s290] sm:$0xff]
      %v1415 = vld [vmem:[%s290 + $0x8] sm:$0xff]
      %v1416 = vld [vmem:[%s290 + $0x10] sm:$0xff]
      %v1417 = vld [vmem:[%s290 + $0x18] sm:$0xff]
      %v1418 = vld [vmem:[%s290 + $0x20] sm:$0xff]
      %v1419 = vld [vmem:[%s290 + $0x28] sm:$0xff]
      %v1420 = vld [vmem:[%s290 + $0x30] sm:$0xff]
      %v1421 = vld [vmem:[%s290 + $0x38] sm:$0xff]
      %v1422 = vld [vmem:[%s290 + $0x40] sm:$0xff]
      %v1423 = vld [vmem:[%s290 + $0x48] sm:$0xff]
      %v1424 = vld [vmem:[%s290 + $0x50] sm:$0xff]
      %v1425 = vld [vmem:[%s290 + $0x58] sm:$0xff]
      %v1426 = vld [vmem:[%s290 + $0x60] sm:$0xff]
      %v1427 = vld [vmem:[%s290 + $0x68] sm:$0xff]
      %v1428 = vld [vmem:[%s290 + $0x70] sm:$0xff]
      %v1429 = vld [vmem:[%s290 + $0x78] sm:$0xff]
      %v1430 = vpack.c.bf16 %v1415, %v1414
      %v1431 = vpack.c.bf16 %v1417, %v1416
      %v1432 = vpack.c.bf16 %v1419, %v1418
      %v1433 = vpack.c.bf16 %v1421, %v1420
      %v1434 = vpack.c.bf16 %v1423, %v1422
      %v1435 = vpack.c.bf16 %v1425, %v1424
      %v1436 = vpack.c.bf16 %v1427, %v1426
      %v1437 = vpack.c.bf16 %v1429, %v1428
      %v1438 = vld [vmem:[%s2] sm:$0xff]
      %v1439 = vld [vmem:[%s2 + $0x8] sm:$0x77]
      %v1440 = vld [vmem:[%s3] sm:$0xff]
      %v1441 = vld [vmem:[%s3 + $0x8] sm:$0xff]
      %v1442 = vld [vmem:[%s3 + $0x10] sm:$0xff]
      %v1443 = vld [vmem:[%s3 + $0x18] sm:$0xff]
      %v1444 = vld [vmem:[%s3 + $0x20] sm:$0xff]
      %v1445 = vld [vmem:[%s3 + $0x28] sm:$0xff]
      %v1446 = vld [vmem:[%s3 + $0x30] sm:$0xff]
      %v1447 = vld [vmem:[%s3 + $0x38] sm:$0xff]
      %v1448 = vld [vmem:[%s3 + $0x40] sm:$0xff]
      %v1449 = vld [vmem:[%s3 + $0x48] sm:$0xff]
      %v1450 = vld [vmem:[%s3 + $0x50] sm:$0xff]
      %v1451 = vld [vmem:[%s3 + $0x58] sm:$0xff]
      %v1452 = vld [vmem:[%s3 + $0x60] sm:$0xff]
      %v1453 = vld [vmem:[%s3 + $0x68] sm:$0xff]
      %v1454 = vld [vmem:[%s3 + $0x70] sm:$0xff]
      %v1455 = vld [vmem:[%s3 + $0x78] sm:$0xff]
      %v1456 = vld [vmem:[%s3 + $0x80] sm:$0xff]
      %v1457 = vld [vmem:[%s3 + $0x88] sm:$0xff]
      %v1458 = vld [vmem:[%s3 + $0x90] sm:$0xff]
      %v1459 = vld [vmem:[%s3 + $0x98] sm:$0xff]
      %v1460 = vld [vmem:[%s3 + $0xa0] sm:$0xff]
      %v1461 = vld [vmem:[%s3 + $0xa8] sm:$0xff]
      %v1484 = vunpack.c.l.b16 %v1440
      %v1485 = vunpack.c.h.b16 %v1440
      %v1486 = vunpack.c.l.b16 %v1441
      %v1487 = vunpack.c.h.b16 %v1441
      %v1488 = vunpack.c.l.b16 %v1442
      %v1489 = vunpack.c.h.b16 %v1442
      %v1490 = vunpack.c.l.b16 %v1443
      %v1491 = vunpack.c.h.b16 %v1443
      %v1492 = vunpack.c.l.b16 %v1444
      %v1493 = vunpack.c.h.b16 %v1444
      %v1494 = vunpack.c.l.b16 %v1445
      %v1495 = vunpack.c.h.b16 %v1445
      %v1496 = vunpack.c.l.b16 %v1446
      %v1497 = vunpack.c.h.b16 %v1446
      %v1498 = vunpack.c.l.b16 %v1447
      %v1499 = vunpack.c.h.b16 %v1447
      %v1500 = vunpack.c.l.b16 %v1448
      %v1501 = vunpack.c.h.b16 %v1448
      %v1502 = vunpack.c.l.b16 %v1449
      %v1503 = vunpack.c.h.b16 %v1449
      %v1504 = vunpack.c.l.b16 %v1450
      %v1505 = vunpack.c.h.b16 %v1450
      %v1506 = vunpack.c.l.b16 %v1451
      %v1507 = vunpack.c.h.b16 %v1451
      %v1508 = vunpack.c.l.b16 %v1452
      %v1509 = vunpack.c.h.b16 %v1452
      %v1510 = vunpack.c.l.b16 %v1453
      %v1511 = vunpack.c.h.b16 %v1453
      %v1512 = vunpack.c.l.b16 %v1454
      %v1513 = vunpack.c.h.b16 %v1454
      %v1514 = vunpack.c.l.b16 %v1455
      %v1515 = vunpack.c.h.b16 %v1455
      %v1516 = vunpack.c.l.b16 %v1456
      %v1517 = vunpack.c.h.b16 %v1456
      %v1518 = vunpack.c.l.b16 %v1457
      %v1519 = vunpack.c.h.b16 %v1457
      %v1520 = vunpack.c.l.b16 %v1458
      %v1521 = vunpack.c.h.b16 %v1458
      %v1522 = vunpack.c.l.b16 %v1459
      %v1523 = vunpack.c.h.b16 %v1459
      %v1524 = vunpack.c.l.b16 %v1460
      %v1525 = vunpack.c.h.b16 %v1460
      %v1526 = vunpack.c.l.b16 %v1461
      %v1527 = vunpack.c.h.b16 %v1461
      %v1528 = vpack.c.b16 %v1486, %v1484
      %v1529 = vpack.c.b16 %v1487, %v1485
      %v1530 = vpack.c.b16 %v1490, %v1488
      %v1531 = vpack.c.b16 %v1491, %v1489
      %v1532 = vpack.c.b16 %v1494, %v1492
      %v1533 = vpack.c.b16 %v1495, %v1493
      %v1534 = vpack.c.b16 %v1498, %v1496
      %v1535 = vpack.c.b16 %v1499, %v1497
      %v1536 = vpack.c.b16 %v1502, %v1500
      %v1537 = vpack.c.b16 %v1503, %v1501
      %v1538 = vpack.c.b16 %v1506, %v1504
      %v1539 = vpack.c.b16 %v1507, %v1505
      %v1540 = vpack.c.b16 %v1510, %v1508
      %v1541 = vpack.c.b16 %v1511, %v1509
      %v1542 = vpack.c.b16 %v1514, %v1512
      %v1543 = vpack.c.b16 %v1515, %v1513
      %v1544 = vpack.c.b16 %v1518, %v1516
      %v1545 = vpack.c.b16 %v1519, %v1517
      %v1546 = vpack.c.b16 %v1522, %v1520
      %v1547 = vpack.c.b16 %v1523, %v1521
      %v1548 = vpack.c.b16 %v1526, %v1524
      %v1549 = vpack.c.b16 %v1527, %v1525
      %vm1572 = vcmask 392192
      %v1574 = vsel %vm1572, %v1399, 0
      %v1577 = vsel %vm1572, %v1401, 0
      %v1580 = vsel %vm1572, %v1403, 0
      %v1583 = vsel %vm1572, %v1405, 0
      %v1586 = vsel %vm1572, %v1407, 0
      %v1589 = vsel %vm1572, %v1409, 0
      %v1592 = vsel %vm1572, %v1411, 0
      %v1595 = vsel %vm1572, %v1413, 0
      %1597 = vmatprep.subr.bf16.mxu0 %v1529
      %1598 = vmatpush1.bf16.msra.mxu0 %v1528
      %1599 = vmatprep.subr.bf16.mxu0 %v1531
      %1600 = vmatpush1.bf16.msra.mxu0 %v1530
      %1601 = vmatprep.subr.bf16.mxu0 %v1533
      %1602 = vmatpush1.bf16.msra.mxu0 %v1532
      %1603 = vmatprep.subr.bf16.mxu0 %v1535
      %1604 = vmatpush1.bf16.msra.mxu0 %v1534
      %1605 = vmatprep.subr.bf16.mxu0 %v1537
      %1606 = vmatpush1.bf16.msra.mxu0 %v1536
      %1607 = vmatprep.subr.bf16.mxu0 %v1539
      %1608 = vmatpush1.bf16.msra.mxu0 %v1538
      %1609 = vmatprep.subr.bf16.mxu0 %v1541
      %1610 = vmatpush1.bf16.msra.mxu0 %v1540
      %1611 = vmatprep.subr.bf16.mxu0 %v1543
      %1612 = vmatpush1.bf16.msra.mxu0 %v1542
      %1613 = vmatprep.subr.bf16.mxu0 %v1545
      %1614 = vmatpush1.bf16.msra.mxu0 %v1544
      %1615 = vmatprep.subr.bf16.mxu0 %v1547
      %1616 = vmatpush1.bf16.msra.mxu0 %v1546
      %1617 = vmatprep.subr.bf16.mxu0 %v1549
      %1618 = vmatpush1.bf16.msra.mxu0 %v1548
      %1619 = vmatprep.subr.bf16.mxu0 0
      %1620 = vmatpush1.bf16.msra.mxu0 0
      %1621 = vmatprep.subr.bf16.mxu0 0
      %1622 = vmatpush1.bf16.msra.mxu0 0
      %1623 = vmatprep.subr.bf16.mxu0 0
      %1624 = vmatpush1.bf16.msra.mxu0 0
      %1625 = vmatprep.subr.bf16.mxu0 0
      %1626 = vmatpush1.bf16.msra.mxu0 0
      %1627 = vmatprep.subr.bf16.mxu0 0
      %1628 = vmatpush1.bf16.msra.mxu0 0
      %1629 = vmatprep.mubr.bf16.mxu0 %v1574
      %1630 = vmatmul.mubr.bf16.gmra.mrb[0].mxu0 %v1398
      %v1631 = vpop.f32.mrb[0].mxu0
      %v1632 = vadd.f32 0.0, %v1631
      %v1633 = vpop.f32.mrb[0].mxu0
      %v1634 = vadd.f32 0.0, %v1633
      %v1635 = vpop.f32.mrb[0].mxu0
      %v1636 = vadd.f32 0.0, %v1635
      %v1637 = vpop.f32.mrb[0].mxu0
      %v1638 = vadd.f32 0.0, %v1637
      %1639 = vmatprep.mubr.bf16.mxu0 %v1577
      %1640 = vmatmul.mubr.bf16.gmra.mrb[0].mxu0 %v1400
      %v1641 = vpop.f32.mrb[0].mxu0
      %v1642 = vadd.f32 0.0, %v1641
      %v1643 = vpop.f32.mrb[0].mxu0
      %v1644 = vadd.f32 0.0, %v1643
      %v1645 = vpop.f32.mrb[0].mxu0
      %v1646 = vadd.f32 0.0, %v1645
      %v1647 = vpop.f32.mrb[0].mxu0
      %v1648 = vadd.f32 0.0, %v1647
      %1649 = vmatprep.mubr.bf16.mxu0 %v1580
      %1650 = vmatmul.mubr.bf16.gmra.mrb[0].mxu0 %v1402
      %v1651 = vpop.f32.mrb[0].mxu0
      %v1652 = vadd.f32 0.0, %v1651
      %v1653 = vpop.f32.mrb[0].mxu0
      %v1654 = vadd.f32 0.0, %v1653
      %v1655 = vpop.f32.mrb[0].mxu0
      %v1656 = vadd.f32 0.0, %v1655
      %v1657 = vpop.f32.mrb[0].mxu0
      %v1658 = vadd.f32 0.0, %v1657
      %1659 = vmatprep.mubr.bf16.mxu0 %v1583
      %1660 = vmatmul.mubr.bf16.gmra.mrb[0].mxu0 %v1404
      %v1661 = vpop.f32.mrb[0].mxu0
      %v1662 = vadd.f32 0.0, %v1661
      %v1663 = vpop.f32.mrb[0].mxu0
      %v1664 = vadd.f32 0.0, %v1663
      %v1665 = vpop.f32.mrb[0].mxu0
      %v1666 = vadd.f32 0.0, %v1665
      %v1667 = vpop.f32.mrb[0].mxu0
      %v1668 = vadd.f32 0.0, %v1667
      %1669 = vmatprep.mubr.bf16.mxu0 %v1586
      %1670 = vmatmul.mubr.bf16.gmra.mrb[0].mxu0 %v1406
      %v1671 = vpop.f32.mrb[0].mxu0
      %v1672 = vadd.f32 0.0, %v1671
      %v1673 = vpop.f32.mrb[0].mxu0
      %v1674 = vadd.f32 0.0, %v1673
      %v1675 = vpop.f32.mrb[0].mxu0
      %v1676 = vadd.f32 0.0, %v1675
      %v1677 = vpop.f32.mrb[0].mxu0
      %v1678 = vadd.f32 0.0, %v1677
      %1679 = vmatprep.mubr.bf16.mxu0 %v1589
      %1680 = vmatmul.mubr.bf16.gmra.mrb[0].mxu0 %v1408
      %v1681 = vpop.f32.mrb[0].mxu0
      %v1682 = vadd.f32 0.0, %v1681
      %v1683 = vpop.f32.mrb[0].mxu0
      %v1684 = vadd.f32 0.0, %v1683
      %v1685 = vpop.f32.mrb[0].mxu0
      %v1686 = vadd.f32 0.0, %v1685
      %v1687 = vpop.f32.mrb[0].mxu0
      %v1688 = vadd.f32 0.0, %v1687
      %1689 = vmatprep.mubr.bf16.mxu0 %v1592
      %1690 = vmatmul.mubr.bf16.gmra.mrb[0].mxu0 %v1410
      %v1691 = vpop.f32.mrb[0].mxu0
      %v1692 = vadd.f32 0.0, %v1691
      %v1693 = vpop.f32.mrb[0].mxu0
      %v1694 = vadd.f32 0.0, %v1693
      %v1695 = vpop.f32.mrb[0].mxu0
      %v1696 = vadd.f32 0.0, %v1695
      %v1697 = vpop.f32.mrb[0].mxu0
      %v1698 = vadd.f32 0.0, %v1697
      %1699 = vmatprep.mubr.bf16.mxu0 %v1595
      %1700 = vmatmul.mubr.bf16.gmra.mrb[0].mxu0 %v1412
      %v1701 = vpop.f32.mrb[0].mxu0
      %v1702 = vadd.f32 0.0, %v1701
      %v1703 = vpop.f32.mrb[0].mxu0
      %v1704 = vadd.f32 0.0, %v1703
      %v1705 = vpop.f32.mrb[0].mxu0
      %v1706 = vadd.f32 0.0, %v1705
      %v1707 = vpop.f32.mrb[0].mxu0
      %v1708 = vadd.f32 0.0, %v1707
      %1709 = vdwg.mxu0
      %v1712 = vunpack.c.l.b16 %v1438
      %v1713 = vunpack.c.h.b16 %v1438
      %v1714 = vunpack.c.l.b16 %v1439
      %v1715 = vunpack.c.h.b16 %v1439
      %v1716 = vpack.c.b16 %v1714, %v1712
      %v1717 = vpack.c.b16 %v1715, %v1713
      %vm1718 = vcmask 113664
      %v1720 = vsel %vm1718, %v1430, 0
      %v1723 = vsel %vm1718, %v1431, 0
      %v1726 = vsel %vm1718, %v1432, 0
      %v1729 = vsel %vm1718, %v1433, 0
      %v1732 = vsel %vm1718, %v1434, 0
      %v1735 = vsel %vm1718, %v1435, 0
      %v1738 = vsel %vm1718, %v1436, 0
      %v1741 = vsel %vm1718, %v1437, 0
      %vm1743 = vcmask 1046528
      %v1745 = vsel %vm1743, %v1716, 0
      %v1748 = vsel %vm1743, %v1717, 0
      %1750 = vmatprep.subr.bf16.mxu0 %v1748
      %1751 = vmatpush1.bf16.msra.mxu0 %v1745
      %1752 = vmatprep.subr.bf16.mxu0 0
      %1753 = vmatpush1.bf16.msra.mxu0 0
      %1754 = vmatprep.subr.bf16.mxu0 0
      %1755 = vmatpush1.bf16.msra.mxu0 0
      %1756 = vmatprep.subr.bf16.mxu0 0
      %1757 = vmatpush1.bf16.msra.mxu0 0
      %1758 = vmatprep.subr.bf16.mxu0 0
      %1759 = vmatpush1.bf16.msra.mxu0 0
      %1760 = vmatprep.subr.bf16.mxu0 0
      %1761 = vmatpush1.bf16.msra.mxu0 0
      %1762 = vmatprep.subr.bf16.mxu0 0
      %1763 = vmatpush1.bf16.msra.mxu0 0
      %1764 = vmatprep.subr.bf16.mxu0 0
      %1765 = vmatpush1.bf16.msra.mxu0 0
      %1766 = vmatprep.subr.bf16.mxu0 0
      %1767 = vmatpush1.bf16.msra.mxu0 0
      %1768 = vmatprep.subr.bf16.mxu0 0
      %1769 = vmatpush1.bf16.msra.mxu0 0
      %1770 = vmatprep.subr.bf16.mxu0 0
      %1771 = vmatpush1.bf16.msra.mxu0 0
      %1772 = vmatprep.subr.bf16.mxu0 0
      %1773 = vmatpush1.bf16.msra.mxu0 0
      %1774 = vmatprep.subr.bf16.mxu0 0
      %1775 = vmatpush1.bf16.msra.mxu0 0
      %1776 = vmatprep.subr.bf16.mxu0 0
      %1777 = vmatpush1.bf16.msra.mxu0 0
      %1778 = vmatprep.subr.bf16.mxu0 0
      %1779 = vmatpush1.bf16.msra.mxu0 0
      %1780 = vmatprep.subr.bf16.mxu0 0
      %1781 = vmatpush1.bf16.msra.mxu0 0
      %1782 = vmatprep.mubr.bf16.mxu0 0
      %1783 = vmatmul.mubr.bf16.gmra.mrb[0].mxu0 %v1720
      %v1784 = vpop.f32.mrb[0].mxu0
      %v1785 = vadd.f32 %v1632, %v1784
      %v1786 = vpop.f32.mrb[0].mxu0
      %v1787 = vadd.f32 %v1634, %v1786
      %v1788 = vpop.f32.mrb[0].mxu0
      %v1789 = vadd.f32 %v1636, %v1788
      %v1790 = vpop.f32.mrb[0].mxu0
      %v1791 = vadd.f32 %v1638, %v1790
      %1792 = vmatprep.mubr.bf16.mxu0 0
      %1793 = vmatmul.mubr.bf16.gmra.mrb[0].mxu0 %v1723
      %v1794 = vpop.f32.mrb[0].mxu0
      %v1795 = vadd.f32 %v1642, %v1794
      %v1796 = vpop.f32.mrb[0].mxu0
      %v1797 = vadd.f32 %v1644, %v1796
      %v1798 = vpop.f32.mrb[0].mxu0
      %v1799 = vadd.f32 %v1646, %v1798
      %v1800 = vpop.f32.mrb[0].mxu0
      %v1801 = vadd.f32 %v1648, %v1800
      %1802 = vmatprep.mubr.bf16.mxu0 0
      %1803 = vmatmul.mubr.bf16.gmra.mrb[0].mxu0 %v1726
      %v1804 = vpop.f32.mrb[0].mxu0
      %v1805 = vadd.f32 %v1652, %v1804
      %v1806 = vpop.f32.mrb[0].mxu0
      %v1807 = vadd.f32 %v1654, %v1806
      %v1808 = vpop.f32.mrb[0].mxu0
      %v1809 = vadd.f32 %v1656, %v1808
      %v1810 = vpop.f32.mrb[0].mxu0
      %v1811 = vadd.f32 %v1658, %v1810
      %1812 = vmatprep.mubr.bf16.mxu0 0
      %1813 = vmatmul.mubr.bf16.gmra.mrb[0].mxu0 %v1729
      %v1814 = vpop.f32.mrb[0].mxu0
      %v1815 = vadd.f32 %v1662, %v1814
      %v1816 = vpop.f32.mrb[0].mxu0
      %v1817 = vadd.f32 %v1664, %v1816
      %v1818 = vpop.f32.mrb[0].mxu0
      %v1819 = vadd.f32 %v1666, %v1818
      %v1820 = vpop.f32.mrb[0].mxu0
      %v1821 = vadd.f32 %v1668, %v1820
      %1822 = vmatprep.mubr.bf16.mxu0 0
      %1823 = vmatmul.mubr.bf16.gmra.mrb[0].mxu0 %v1732
      %v1824 = vpop.f32.mrb[0].mxu0
      %v1825 = vadd.f32 %v1672, %v1824
      %v1826 = vpop.f32.mrb[0].mxu0
      %v1827 = vadd.f32 %v1674, %v1826
      %v1828 = vpop.f32.mrb[0].mxu0
      %v1829 = vadd.f32 %v1676, %v1828
      %v1830 = vpop.f32.mrb[0].mxu0
      %v1831 = vadd.f32 %v1678, %v1830
      %1832 = vmatprep.mubr.bf16.mxu0 0
      %1833 = vmatmul.mubr.bf16.gmra.mrb[0].mxu0 %v1735
      %v1834 = vpop.f32.mrb[0].mxu0
      %v1835 = vadd.f32 %v1682, %v1834
      %v1836 = vpop.f32.mrb[0].mxu0
      %v1837 = vadd.f32 %v1684, %v1836
      %v1838 = vpop.f32.mrb[0].mxu0
      %v1839 = vadd.f32 %v1686, %v1838
      %v1840 = vpop.f32.mrb[0].mxu0
      %v1841 = vadd.f32 %v1688, %v1840
      %1842 = vmatprep.mubr.bf16.mxu0 0
      %1843 = vmatmul.mubr.bf16.gmra.mrb[0].mxu0 %v1738
      %v1844 = vpop.f32.mrb[0].mxu0
      %v1845 = vadd.f32 %v1692, %v1844
      %v1846 = vpop.f32.mrb[0].mxu0
      %v1847 = vadd.f32 %v1694, %v1846
      %v1848 = vpop.f32.mrb[0].mxu0
      %v1849 = vadd.f32 %v1696, %v1848
      %v1850 = vpop.f32.mrb[0].mxu0
      %v1851 = vadd.f32 %v1698, %v1850
      %1852 = vmatprep.mubr.bf16.mxu0 0
      %1853 = vmatmul.mubr.bf16.gmra.mrb[0].mxu0 %v1741
      %v1854 = vpop.f32.mrb[0].mxu0
      %v1855 = vadd.f32 %v1702, %v1854
      %v1856 = vpop.f32.mrb[0].mxu0
      %v1857 = vadd.f32 %v1704, %v1856
      %v1858 = vpop.f32.mrb[0].mxu0
      %v1859 = vadd.f32 %v1706, %v1858
      %v1860 = vpop.f32.mrb[0].mxu0
      %v1861 = vadd.f32 %v1708, %v1860
      %1862 = vdwg.mxu0
      %v1863 = vmax.f32 %v1785, 0.0
      %v1864 = vmax.f32 %v1787, 0.0
      %v1865 = vmax.f32 %v1789, 0.0
      %v1866 = vmax.f32 %v1791, 0.0
      %v1867 = vmax.f32 %v1795, 0.0
      %v1868 = vmax.f32 %v1797, 0.0
      %v1869 = vmax.f32 %v1799, 0.0
      %v1870 = vmax.f32 %v1801, 0.0
      %v1871 = vmax.f32 %v1805, 0.0
      %v1872 = vmax.f32 %v1807, 0.0
      %v1873 = vmax.f32 %v1809, 0.0
      %v1874 = vmax.f32 %v1811, 0.0
      %v1875 = vmax.f32 %v1815, 0.0
      %v1876 = vmax.f32 %v1817, 0.0
      %v1877 = vmax.f32 %v1819, 0.0
      %v1878 = vmax.f32 %v1821, 0.0
      %v1879 = vmax.f32 %v1825, 0.0
      %v1880 = vmax.f32 %v1827, 0.0
      %v1881 = vmax.f32 %v1829, 0.0
      %v1882 = vmax.f32 %v1831, 0.0
      %v1883 = vmax.f32 %v1835, 0.0
      %v1884 = vmax.f32 %v1837, 0.0
      %v1885 = vmax.f32 %v1839, 0.0
      %v1886 = vmax.f32 %v1841, 0.0
      %v1887 = vmax.f32 %v1845, 0.0
      %v1888 = vmax.f32 %v1847, 0.0
      %v1889 = vmax.f32 %v1849, 0.0
      %v1890 = vmax.f32 %v1851, 0.0
      %v1891 = vmax.f32 %v1855, 0.0
      %v1892 = vmax.f32 %v1857, 0.0
      %v1893 = vmax.f32 %v1859, 0.0
      %v1894 = vmax.f32 %v1861, 0.0
      %v1895 = vpack.c.bf16 %v1865, %v1863
      %v1896 = vpack.c.bf16 %v1866, %v1864
      %v1897 = vpack.c.bf16 %v1869, %v1867
      %v1898 = vpack.c.bf16 %v1870, %v1868
      %v1899 = vpack.c.bf16 %v1873, %v1871
      %v1900 = vpack.c.bf16 %v1874, %v1872
      %v1901 = vpack.c.bf16 %v1877, %v1875
      %v1902 = vpack.c.bf16 %v1878, %v1876
      %v1903 = vpack.c.bf16 %v1881, %v1879
      %v1904 = vpack.c.bf16 %v1882, %v1880
      %v1905 = vpack.c.bf16 %v1885, %v1883
      %v1906 = vpack.c.bf16 %v1886, %v1884
      %v1907 = vpack.c.bf16 %v1889, %v1887
      %v1908 = vpack.c.bf16 %v1890, %v1888
      %v1909 = vpack.c.bf16 %v1893, %v1891
      %v1910 = vpack.c.bf16 %v1894, %v1892
      %v1911 = vld [vmem:[%s4] sm:$0xf]
      %v1912 = vld [vmem:[%s4 + $0x4] sm:$0xf]
      %v1913 = vld [vmem:[%s4 + $0x8] sm:$0xf]
      %v1914 = vld [vmem:[%s4 + $0xc] sm:$0xf]
      %v1915 = vld [vmem:[%s4 + $0x10] sm:$0xf]
      %v1916 = vld [vmem:[%s4 + $0x14] sm:$0xf]
      %v1917 = vld [vmem:[%s4 + $0x18] sm:$0xf]
      %v1918 = vld [vmem:[%s4 + $0x1c] sm:$0xf]
      %v1919 = vld [vmem:[%s4 + $0x20] sm:$0xf]
      %v1920 = vld [vmem:[%s4 + $0x24] sm:$0xf]
      %v1921 = vld [vmem:[%s4 + $0x28] sm:$0xf]
      %v1922 = vld [vmem:[%s4 + $0x2c] sm:$0xf]
      %v1923 = vld [vmem:[%s4 + $0x30] sm:$0xf]
      %v1924 = vld [vmem:[%s4 + $0x34] sm:$0xf]
      %v1925 = vld [vmem:[%s4 + $0x38] sm:$0xf]
      %v1926 = vld [vmem:[%s4 + $0x3c] sm:$0xf]
      %v1927 = vld [vmem:[%s4 + $0x40] sm:$0xf]
      %v1928 = vld [vmem:[%s4 + $0x44] sm:$0xf]
      %v1929 = vld [vmem:[%s4 + $0x48] sm:$0xf]
      %v1930 = vld [vmem:[%s4 + $0x4c] sm:$0xf]
      %v1931 = vld [vmem:[%s4 + $0x50] sm:$0xf]
      %v1932 = vld [vmem:[%s4 + $0x54] sm:$0xf]
      %v1933 = vld [vmem:[%s4 + $0x58] sm:$0xf]
      %v1934 = vld [vmem:[%s4 + $0x5c] sm:$0xf]
      %v1935 = vld [vmem:[%s4 + $0x60] sm:$0xf]
      %v1936 = vld [vmem:[%s4 + $0x64] sm:$0xf]
      %v1937 = vld [vmem:[%s4 + $0x68] sm:$0xf]
      %v1938 = vld [vmem:[%s4 + $0x6c] sm:$0xf]
      %v1939 = vld [vmem:[%s4 + $0x70] sm:$0xf]
      %v1940 = vld [vmem:[%s4 + $0x74] sm:$0xf]
      %v1941 = vld [vmem:[%s4 + $0x78] sm:$0xf]
      %v1942 = vld [vmem:[%s4 + $0x7c] sm:$0xf]
      %v1943 = vld [vmem:[%s6] sm:$0x1]
      %v1944 = vlaneseq
      %v1945 = vshrl.u32 %v1944, 7
      %v1946 = vsub.s32 0, %v1945
      %v1947 = vrot.slane %v1943, %v1946
      %v1980 = vunpack.c.l.b16 %v1911
      %v1981 = vunpack.c.l.b16 %v1912
      %v1982 = vunpack.c.l.b16 %v1913
      %v1983 = vunpack.c.l.b16 %v1914
      %v1984 = vunpack.c.l.b16 %v1915
      %v1985 = vunpack.c.l.b16 %v1916
      %v1986 = vunpack.c.l.b16 %v1917
      %v1987 = vunpack.c.l.b16 %v1918
      %v1988 = vunpack.c.l.b16 %v1919
      %v1989 = vunpack.c.l.b16 %v1920
      %v1990 = vunpack.c.l.b16 %v1921
      %v1991 = vunpack.c.l.b16 %v1922
      %v1992 = vunpack.c.l.b16 %v1923
      %v1993 = vunpack.c.l.b16 %v1924
      %v1994 = vunpack.c.l.b16 %v1925
      %v1995 = vunpack.c.l.b16 %v1926
      %v1996 = vunpack.c.l.b16 %v1927
      %v1997 = vunpack.c.l.b16 %v1928
      %v1998 = vunpack.c.l.b16 %v1929
      %v1999 = vunpack.c.l.b16 %v1930
      %v2000 = vunpack.c.l.b16 %v1931
      %v2001 = vunpack.c.l.b16 %v1932
      %v2002 = vunpack.c.l.b16 %v1933
      %v2003 = vunpack.c.l.b16 %v1934
      %v2004 = vunpack.c.l.b16 %v1935
      %v2005 = vunpack.c.l.b16 %v1936
      %v2006 = vunpack.c.l.b16 %v1937
      %v2007 = vunpack.c.l.b16 %v1938
      %v2008 = vunpack.c.l.b16 %v1939
      %v2009 = vunpack.c.l.b16 %v1940
      %v2010 = vunpack.c.l.b16 %v1941
      %v2011 = vunpack.c.l.b16 %v1942
      %v2012 = vpack.c.b16 %v1981, %v1980
      %v2013 = vpack.c.b16 %v1983, %v1982
      %v2014 = vpack.c.b16 %v1985, %v1984
      %v2015 = vpack.c.b16 %v1987, %v1986
      %v2016 = vpack.c.b16 %v1989, %v1988
      %v2017 = vpack.c.b16 %v1991, %v1990
      %v2018 = vpack.c.b16 %v1993, %v1992
      %v2019 = vpack.c.b16 %v1995, %v1994
      %v2020 = vpack.c.b16 %v1997, %v1996
      %v2021 = vpack.c.b16 %v1999, %v1998
      %v2022 = vpack.c.b16 %v2001, %v2000
      %v2023 = vpack.c.b16 %v2003, %v2002
      %v2024 = vpack.c.b16 %v2005, %v2004
      %v2025 = vpack.c.b16 %v2007, %v2006
      %v2026 = vpack.c.b16 %v2009, %v2008
      %v2027 = vpack.c.b16 %v2011, %v2010
      %2044 = vmatprep.subr.bf16.mxu0 0
      %2045 = vmatpush1.bf16.msra.mxu0 %v2012
      %2046 = vmatprep.subr.bf16.mxu0 0
      %2047 = vmatpush1.bf16.msra.mxu0 %v2013
      %2048 = vmatprep.subr.bf16.mxu0 0
      %2049 = vmatpush1.bf16.msra.mxu0 %v2014
      %2050 = vmatprep.subr.bf16.mxu0 0
      %2051 = vmatpush1.bf16.msra.mxu0 %v2015
      %2052 = vmatprep.subr.bf16.mxu0 0
      %2053 = vmatpush1.bf16.msra.mxu0 %v2016
      %2054 = vmatprep.subr.bf16.mxu0 0
      %2055 = vmatpush1.bf16.msra.mxu0 %v2017
      %2056 = vmatprep.subr.bf16.mxu0 0
      %2057 = vmatpush1.bf16.msra.mxu0 %v2018
      %2058 = vmatprep.subr.bf16.mxu0 0
      %2059 = vmatpush1.bf16.msra.mxu0 %v2019
      %2060 = vmatprep.subr.bf16.mxu0 0
      %2061 = vmatpush1.bf16.msra.mxu0 %v2020
      %2062 = vmatprep.subr.bf16.mxu0 0
      %2063 = vmatpush1.bf16.msra.mxu0 %v2021
      %2064 = vmatprep.subr.bf16.mxu0 0
      %2065 = vmatpush1.bf16.msra.mxu0 %v2022
      %2066 = vmatprep.subr.bf16.mxu0 0
      %2067 = vmatpush1.bf16.msra.mxu0 %v2023
      %2068 = vmatprep.subr.bf16.mxu0 0
      %2069 = vmatpush1.bf16.msra.mxu0 %v2024
      %2070 = vmatprep.subr.bf16.mxu0 0
      %2071 = vmatpush1.bf16.msra.mxu0 %v2025
      %2072 = vmatprep.subr.bf16.mxu0 0
      %2073 = vmatpush1.bf16.msra.mxu0 %v2026
      %2074 = vmatprep.subr.bf16.mxu0 0
      %2075 = vmatpush1.bf16.msra.mxu0 %v2027
      %2076 = vmatprep.mubr.bf16.mxu0 %v1896
      %2077 = vmatmul.mubr.bf16.gmra.mrb[0].mxu0 %v1895
      %v2078 = vpop.f32.mrb[0].mxu0
      %v2079 = vadd.f32 %v1947, %v2078
      %v2080 = vpop.f32.mrb[0].mxu0
      %v2081 = vpop.f32.mrb[0].mxu0
      %v2082 = vadd.f32 %v1947, %v2081
      %v2083 = vpop.f32.mrb[0].mxu0
      %2084 = vmatprep.mubr.bf16.mxu0 %v1898
      %2085 = vmatmul.mubr.bf16.gmra.mrb[0].mxu0 %v1897
      %v2086 = vpop.f32.mrb[0].mxu0
      %v2087 = vadd.f32 %v1947, %v2086
      %v2088 = vpop.f32.mrb[0].mxu0
      %v2089 = vpop.f32.mrb[0].mxu0
      %v2090 = vadd.f32 %v1947, %v2089
      %v2091 = vpop.f32.mrb[0].mxu0
      %2092 = vmatprep.mubr.bf16.mxu0 %v1900
      %2093 = vmatmul.mubr.bf16.gmra.mrb[0].mxu0 %v1899
      %v2094 = vpop.f32.mrb[0].mxu0
      %v2095 = vadd.f32 %v1947, %v2094
      %v2096 = vpop.f32.mrb[0].mxu0
      %v2097 = vpop.f32.mrb[0].mxu0
      %v2098 = vadd.f32 %v1947, %v2097
      %v2099 = vpop.f32.mrb[0].mxu0
      %2100 = vmatprep.mubr.bf16.mxu0 %v1902
      %2101 = vmatmul.mubr.bf16.gmra.mrb[0].mxu0 %v1901
      %v2102 = vpop.f32.mrb[0].mxu0
      %v2103 = vadd.f32 %v1947, %v2102
      %v2104 = vpop.f32.mrb[0].mxu0
      %v2105 = vpop.f32.mrb[0].mxu0
      %v2106 = vadd.f32 %v1947, %v2105
      %v2107 = vpop.f32.mrb[0].mxu0
      %2108 = vmatprep.mubr.bf16.mxu0 %v1904
      %2109 = vmatmul.mubr.bf16.gmra.mrb[0].mxu0 %v1903
      %v2110 = vpop.f32.mrb[0].mxu0
      %v2111 = vadd.f32 %v1947, %v2110
      %v2112 = vpop.f32.mrb[0].mxu0
      %v2113 = vpop.f32.mrb[0].mxu0
      %v2114 = vadd.f32 %v1947, %v2113
      %v2115 = vpop.f32.mrb[0].mxu0
      %2116 = vmatprep.mubr.bf16.mxu0 %v1906
      %2117 = vmatmul.mubr.bf16.gmra.mrb[0].mxu0 %v1905
      %v2118 = vpop.f32.mrb[0].mxu0
      %v2119 = vadd.f32 %v1947, %v2118
      %v2120 = vpop.f32.mrb[0].mxu0
      %v2121 = vpop.f32.mrb[0].mxu0
      %v2122 = vadd.f32 %v1947, %v2121
      %v2123 = vpop.f32.mrb[0].mxu0
      %2124 = vmatprep.mubr.bf16.mxu0 %v1908
      %2125 = vmatmul.mubr.bf16.gmra.mrb[0].mxu0 %v1907
      %v2126 = vpop.f32.mrb[0].mxu0
      %v2127 = vadd.f32 %v1947, %v2126
      %v2128 = vpop.f32.mrb[0].mxu0
      %v2129 = vpop.f32.mrb[0].mxu0
      %v2130 = vadd.f32 %v1947, %v2129
      %v2131 = vpop.f32.mrb[0].mxu0
      %2132 = vmatprep.mubr.bf16.mxu0 %v1910
      %2133 = vmatmul.mubr.bf16.gmra.mrb[0].mxu0 %v1909
      %v2134 = vpop.f32.mrb[0].mxu0
      %v2135 = vadd.f32 %v1947, %v2134
      %v2136 = vpop.f32.mrb[0].mxu0
      %v2137 = vpop.f32.mrb[0].mxu0
      %v2138 = vadd.f32 %v1947, %v2137
      %v2139 = vpop.f32.mrb[0].mxu0
      %2140 = vdwg.mxu0
      %v2141 = vmax.f32 %v2079, 0.0
      %v2142 = vmax.f32 %v2082, 0.0
      %v2143 = vmax.f32 %v2087, 0.0
      %v2144 = vmax.f32 %v2090, 0.0
      %v2145 = vmax.f32 %v2095, 0.0
      %v2146 = vmax.f32 %v2098, 0.0
      %v2147 = vmax.f32 %v2103, 0.0
      %v2148 = vmax.f32 %v2106, 0.0
      %v2149 = vmax.f32 %v2111, 0.0
      %v2150 = vmax.f32 %v2114, 0.0
      %v2151 = vmax.f32 %v2119, 0.0
      %v2152 = vmax.f32 %v2122, 0.0
      %v2153 = vmax.f32 %v2127, 0.0
      %v2154 = vmax.f32 %v2130, 0.0
      %v2155 = vmax.f32 %v2135, 0.0
      %v2156 = vmax.f32 %v2138, 0.0
      %v2157 = vpack.c.bf16 %v2142, %v2141
      %v2158 = vpack.c.bf16 %v2144, %v2143
      %v2159 = vpack.c.bf16 %v2146, %v2145
      %v2160 = vpack.c.bf16 %v2148, %v2147
      %v2161 = vpack.c.bf16 %v2150, %v2149
      %v2162 = vpack.c.bf16 %v2152, %v2151
      %v2163 = vpack.c.bf16 %v2154, %v2153
      %v2164 = vpack.c.bf16 %v2156, %v2155
      %v2165 = vld [vmem:[%s5] sm:$0xf]
      %v2166 = vld [vmem:[%s5 + $0x4] sm:$0xf]
      %v2167 = vld [vmem:[%s5 + $0x8] sm:$0xf]
      %v2168 = vld [vmem:[%s5 + $0xc] sm:$0xf]
      %v2169 = vld [vmem:[%s5 + $0x10] sm:$0xf]
      %v2170 = vld [vmem:[%s5 + $0x14] sm:$0xf]
      %v2171 = vld [vmem:[%s5 + $0x18] sm:$0xf]
      %v2172 = vld [vmem:[%s5 + $0x1c] sm:$0xf]
      %v2173 = vld [vmem:[%s5 + $0x20] sm:$0xf]
      %v2174 = vld [vmem:[%s5 + $0x24] sm:$0xf]
      %v2175 = vld [vmem:[%s5 + $0x28] sm:$0xf]
      %v2176 = vld [vmem:[%s5 + $0x2c] sm:$0xf]
      %v2177 = vld [vmem:[%s5 + $0x30] sm:$0xf]
      %v2178 = vld [vmem:[%s5 + $0x34] sm:$0xf]
      %v2179 = vld [vmem:[%s5 + $0x38] sm:$0xf]
      %v2180 = vld [vmem:[%s5 + $0x3c] sm:$0xf]
      %v2181 = vld [vmem:[%s6 + $0x1] sm:$0x1]
      %v2182 = vlaneseq
      %v2183 = vshrl.u32 %v2182, 7
      %v2184 = vsub.s32 0, %v2183
      %v2185 = vrot.slane %v2181, %v2184
      %v2202 = vunpack.c.l.b16 %v2165
      %v2203 = vunpack.c.l.b16 %v2166
      %v2204 = vunpack.c.l.b16 %v2167
      %v2205 = vunpack.c.l.b16 %v2168
      %v2206 = vunpack.c.l.b16 %v2169
      %v2207 = vunpack.c.l.b16 %v2170
      %v2208 = vunpack.c.l.b16 %v2171
      %v2209 = vunpack.c.l.b16 %v2172
      %v2210 = vunpack.c.l.b16 %v2173
      %v2211 = vunpack.c.l.b16 %v2174
      %v2212 = vunpack.c.l.b16 %v2175
      %v2213 = vunpack.c.l.b16 %v2176
      %v2214 = vunpack.c.l.b16 %v2177
      %v2215 = vunpack.c.l.b16 %v2178
      %v2216 = vunpack.c.l.b16 %v2179
      %v2217 = vunpack.c.l.b16 %v2180
      %v2218 = vpack.c.b16 %v2203, %v2202
      %v2219 = vpack.c.b16 %v2205, %v2204
      %v2220 = vpack.c.b16 %v2207, %v2206
      %v2221 = vpack.c.b16 %v2209, %v2208
      %v2222 = vpack.c.b16 %v2211, %v2210
      %v2223 = vpack.c.b16 %v2213, %v2212
      %v2224 = vpack.c.b16 %v2215, %v2214
      %v2225 = vpack.c.b16 %v2217, %v2216
      %2234 = vmatprep.subr.bf16.mxu0 0
      %2235 = vmatpush1.bf16.msra.mxu0 %v2218
      %2236 = vmatprep.subr.bf16.mxu0 0
      %2237 = vmatpush1.bf16.msra.mxu0 %v2219
      %2238 = vmatprep.subr.bf16.mxu0 0
      %2239 = vmatpush1.bf16.msra.mxu0 %v2220
      %2240 = vmatprep.subr.bf16.mxu0 0
      %2241 = vmatpush1.bf16.msra.mxu0 %v2221
      %2242 = vmatprep.subr.bf16.mxu0 0
      %2243 = vmatpush1.bf16.msra.mxu0 %v2222
      %2244 = vmatprep.subr.bf16.mxu0 0
      %2245 = vmatpush1.bf16.msra.mxu0 %v2223
      %2246 = vmatprep.subr.bf16.mxu0 0
      %2247 = vmatpush1.bf16.msra.mxu0 %v2224
      %2248 = vmatprep.subr.bf16.mxu0 0
      %2249 = vmatpush1.bf16.msra.mxu0 %v2225
      %2250 = vmatprep.subr.bf16.mxu0 0
      %2251 = vmatpush1.bf16.msra.mxu0 0
      %2252 = vmatprep.subr.bf16.mxu0 0
      %2253 = vmatpush1.bf16.msra.mxu0 0
      %2254 = vmatprep.subr.bf16.mxu0 0
      %2255 = vmatpush1.bf16.msra.mxu0 0
      %2256 = vmatprep.subr.bf16.mxu0 0
      %2257 = vmatpush1.bf16.msra.mxu0 0
      %2258 = vmatprep.subr.bf16.mxu0 0
      %2259 = vmatpush1.bf16.msra.mxu0 0
      %2260 = vmatprep.subr.bf16.mxu0 0
      %2261 = vmatpush1.bf16.msra.mxu0 0
      %2262 = vmatprep.subr.bf16.mxu0 0
      %2263 = vmatpush1.bf16.msra.mxu0 0
      %2264 = vmatprep.subr.bf16.mxu0 0
      %2265 = vmatpush1.bf16.msra.mxu0 0
      %2266 = vmatprep.mubr.bf16.mxu0 0
      %2267 = vmatmul.mubr.bf16.gmra.mrb[0].mxu0 %v2157
      %v2268 = vpop.f32.mrb[0].mxu0
      %v2269 = vadd.f32 %v2185, %v2268
      %v2270 = vpop.f32.mrb[0].mxu0
      %v2271 = vpop.f32.mrb[0].mxu0
      %v2272 = vadd.f32 %v2185, %v2271
      %v2273 = vpop.f32.mrb[0].mxu0
      %2274 = vmatprep.mubr.bf16.mxu0 0
      %2275 = vmatmul.mubr.bf16.gmra.mrb[0].mxu0 %v2158
      %v2276 = vpop.f32.mrb[0].mxu0
      %v2277 = vadd.f32 %v2185, %v2276
      %v2278 = vpop.f32.mrb[0].mxu0
      %v2279 = vpop.f32.mrb[0].mxu0
      %v2280 = vadd.f32 %v2185, %v2279
      %v2281 = vpop.f32.mrb[0].mxu0
      %2282 = vmatprep.mubr.bf16.mxu0 0
      %2283 = vmatmul.mubr.bf16.gmra.mrb[0].mxu0 %v2159
      %v2284 = vpop.f32.mrb[0].mxu0
      %v2285 = vadd.f32 %v2185, %v2284
      %v2286 = vpop.f32.mrb[0].mxu0
      %v2287 = vpop.f32.mrb[0].mxu0
      %v2288 = vadd.f32 %v2185, %v2287
      %v2289 = vpop.f32.mrb[0].mxu0
      %2290 = vmatprep.mubr.bf16.mxu0 0
      %2291 = vmatmul.mubr.bf16.gmra.mrb[0].mxu0 %v2160
      %v2292 = vpop.f32.mrb[0].mxu0
      %v2293 = vadd.f32 %v2185, %v2292
      %v2294 = vpop.f32.mrb[0].mxu0
      %v2295 = vpop.f32.mrb[0].mxu0
      %v2296 = vadd.f32 %v2185, %v2295
      %v2297 = vpop.f32.mrb[0].mxu0
      %2298 = vmatprep.mubr.bf16.mxu0 0
      %2299 = vmatmul.mubr.bf16.gmra.mrb[0].mxu0 %v2161
      %v2300 = vpop.f32.mrb[0].mxu0
      %v2301 = vadd.f32 %v2185, %v2300
      %v2302 = vpop.f32.mrb[0].mxu0
      %v2303 = vpop.f32.mrb[0].mxu0
      %v2304 = vadd.f32 %v2185, %v2303
      %v2305 = vpop.f32.mrb[0].mxu0
      %2306 = vmatprep.mubr.bf16.mxu0 0
      %2307 = vmatmul.mubr.bf16.gmra.mrb[0].mxu0 %v2162
      %v2308 = vpop.f32.mrb[0].mxu0
      %v2309 = vadd.f32 %v2185, %v2308
      %v2310 = vpop.f32.mrb[0].mxu0
      %v2311 = vpop.f32.mrb[0].mxu0
      %v2312 = vadd.f32 %v2185, %v2311
      %v2313 = vpop.f32.mrb[0].mxu0
      %2314 = vmatprep.mubr.bf16.mxu0 0
      %2315 = vmatmul.mubr.bf16.gmra.mrb[0].mxu0 %v2163
      %v2316 = vpop.f32.mrb[0].mxu0
      %v2317 = vadd.f32 %v2185, %v2316
      %v2318 = vpop.f32.mrb[0].mxu0
      %v2319 = vpop.f32.mrb[0].mxu0
      %v2320 = vadd.f32 %v2185, %v2319
      %v2321 = vpop.f32.mrb[0].mxu0
      %2322 = vmatprep.mubr.bf16.mxu0 0
      %2323 = vmatmul.mubr.bf16.gmra.mrb[0].mxu0 %v2164
      %v2324 = vpop.f32.mrb[0].mxu0
      %v2325 = vadd.f32 %v2185, %v2324
      %v2326 = vpop.f32.mrb[0].mxu0
      %v2327 = vpop.f32.mrb[0].mxu0
      %v2328 = vadd.f32 %v2185, %v2327
      %v2329 = vpop.f32.mrb[0].mxu0
      %2330 = vdwg.mxu0
      %2331 = vst [vmem:[%s302] sm:$0xff] %v2269
      %2332 = vst [vmem:[%s302 + $0x8] sm:$0xff] %v2272
      %2333 = vst [vmem:[%s302 + $0x10] sm:$0xff] %v2277
      %2334 = vst [vmem:[%s302 + $0x18] sm:$0xff] %v2280
      %2335 = vst [vmem:[%s302 + $0x20] sm:$0xff] %v2285
      %2336 = vst [vmem:[%s302 + $0x28] sm:$0xff] %v2288
      %2337 = vst [vmem:[%s302 + $0x30] sm:$0xff] %v2293
      %2338 = vst [vmem:[%s302 + $0x38] sm:$0xff] %v2296
      %2339 = vst [vmem:[%s302 + $0x40] sm:$0xff] %v2301
      %2340 = vst [vmem:[%s302 + $0x48] sm:$0xff] %v2304
      %2341 = vst [vmem:[%s302 + $0x50] sm:$0xff] %v2309
      %2342 = vst [vmem:[%s302 + $0x58] sm:$0xff] %v2312
      %2343 = vst [vmem:[%s302 + $0x60] sm:$0xff] %v2317
      %2344 = vst [vmem:[%s302 + $0x68] sm:$0xff] %v2320
      %2345 = vst [vmem:[%s302 + $0x70] sm:$0xff] %v2325
      %2346 = vst [vmem:[%s302 + $0x78] sm:$0xff] %v2328
      %s2347 = smul.u32 16, %s18
      %p2348 = scmp.lt.s32.totalorder %s2347, 31
      %s2349 = scalar_select %p2348, %s2347, 31
      %s2350 = smul.addr %s2349, 8
      %s2351 = scalar_lea.vmem %s7, %s2350
      // Predicated region
      $region49: #{envmodel_forward.1} parent=47 // pred_check
        %p2352 = pneg %p193
      $region50: #{envmodel_forward.1} parent=47 // pred_check_branch
        %2354 = sbr.rel (%p2352) target = $region52
      $region51: #{envmodel_forward.1} parent=47 // pred_region
        %s2355 = smul.u32 16, %s18
      $region52: #{envmodel_forward.1} parent=47 // pred_fallthru
        _
    $region48: #{envmodel_forward.1} parent=5 // pred_fallthru
      _
    %p2356 = scmp.le.s32.totalorder 2, %s13
    // Predicated region
    $region53: #{envmodel_forward.1} parent=5 // pred_check
      %p2357 = pneg %p2356
    $region54: #{envmodel_forward.1} parent=5 // pred_check_branch
      %2359 = sbr.rel (%p2357) target = $region56
    $region55: #{envmodel_forward.1} parent=5 // pred_region
      %s2360 = ssub.s32 %s13, 2
      // Predicated region
      $region57: #{envmodel_forward.1} parent=55 // pred_check
        %p2361 = pneg %p199
      $region58: #{envmodel_forward.1} parent=55 // pred_check_branch
        %2363 = sbr.rel (%p2361) target = $region60
      $region59: #{envmodel_forward.1} parent=55 // pred_region
        %s2364 = smul.u32 16, %s19
        %p2365 = scmp.lt.s32.totalorder %s2364, 31
        %s2366 = scalar_select %p2365, %s2364, 31
        %s2367 = smul.addr %s2366, 8
        %s2368 = scalar_lea.vmem %s7, %s2367
      $region60: #{envmodel_forward.1} parent=55 // pred_fallthru
        _
    $region56: #{envmodel_forward.1} parent=5 // pred_fallthru
      _
  $region6: #{envmodel_forward.1} parent=0 // loop_footer
    %s17 = sadd.s32 1, %s13
  $region7: #{envmodel_forward.1} parent=0 // loop_footer_branch
    %12 = sbr.rel target = $region3
  $region8: #{envmodel_forward.1} parent=0 // loop_exit
    _

</llo_original>
